<compile_context>
chip_gen: v7x
topology: tpu7x:2x2x1
jax: 0.10.0
libtpu: 0.0.40
codegen_flags: <defaults>
</compile_context>

<pallas_src>
import jax
import jax.numpy as jnp
from jax.experimental import pallas as pl
from jax.experimental.pallas import tpu as pltpu

# LIF neuron hyper-parameters (same for both layers).
DECAY = 0.9
THRESH = 1.0


def spiking_sequential_forward(x, w1, w2, *, t_blk=8, b_blk=None):
    """x: (T, B, F_in) f32 spike trains; w1: (F_in, H); w2: (H, F_out).

    Weights are stored as (in, out) = W^T of the F.linear weight so the hot
    path is a plain x @ W MXU matmul.  Returns (T, B, F_out) f32 spikes.
    """
    T, B, F_in = x.shape
    H = w1.shape[1]
    F_out = w2.shape[1]
    if b_blk is None:
        b_blk = B
    assert T % t_blk == 0, "T must be a multiple of t_blk"
    assert B % b_blk == 0, "B must be a multiple of b_blk"

    # Binary spikes are exact in bf16; bf16 weights double MXU throughput and
    # halve the resident weight footprint (matters on v7x's 64 MiB VMEM).
    w1 = w1.astype(jnp.bfloat16)
    w2 = w2.astype(jnp.bfloat16)

    def kernel(x_ref, w1_ref, w2_ref, out_ref, v1_ref, v2_ref, i1_ref):
        # x_ref  : (t_blk, b_blk, F_in)    input spikes for this time block
        # w1_ref : (F_in, H) bf16          layer-1 weights (resident)
        # w2_ref : (H, F_out) bf16         layer-2 weights (resident)
        # out_ref: (t_blk, b_blk, F_out)   output spikes for this time block
        # v1_ref : (b_blk, H) f32          layer-1 membrane potential (persistent)
        # v2_ref : (b_blk, F_out) f32      layer-2 membrane potential (persistent)
        # i1_ref : (t_blk, b_blk, H) f32   hoisted layer-1 synaptic currents

        # reset_state() at the start of every batch tile's time sweep.
        @pl.when(pl.program_id(1) == 0)
        def _():
            v1_ref[...] = jnp.zeros_like(v1_ref)
            v2_ref[...] = jnp.zeros_like(v2_ref)

        # ---- layer-1 synapse, hoisted over the whole time block (one big
        #      MXU matmul: M = t_blk*b_blk instead of M = b_blk) ----
        x2d = x_ref[...].reshape(t_blk * b_blk, F_in).astype(jnp.bfloat16)
        i1 = jnp.dot(x2d, w1_ref[...], preferred_element_type=jnp.float32)
        i1_ref[...] = i1.reshape(t_blk, b_blk, H)

        # ---- sequential LIF recurrence + layer-2 synapse ----
        def step(t, carry):
            # layer 1 LIF (state math in f32)
            v1 = DECAY * v1_ref[...] + i1_ref[t]
            fire1 = v1 >= THRESH
            s1 = jnp.where(fire1, 1.0, 0.0)
            v1_ref[...] = jnp.where(fire1, 0.0, v1)

            # layer 2 synapse + LIF
            i2 = jnp.dot(s1.astype(jnp.bfloat16), w2_ref[...],
                         preferred_element_type=jnp.float32)
            v2 = DECAY * v2_ref[...] + i2
            fire2 = v2 >= THRESH
            out_ref[t] = jnp.where(fire2, 1.0, 0.0)
            v2_ref[...] = jnp.where(fire2, 0.0, v2)
            return carry

        jax.lax.fori_loop(0, t_blk, step, 0, unroll=True)

    # batch tiles OUTER (parallel, independent), time blocks INNER (sequential)
    grid = (B // b_blk, T // t_blk)

    grid_spec = pltpu.PrefetchScalarGridSpec(
        num_scalar_prefetch=0,
        grid=grid,
        in_specs=[
            pl.BlockSpec((t_blk, b_blk, F_in), lambda b, t: (t, b, 0)),
            # Constant index_map -> weights stay resident across the grid.
            pl.BlockSpec((F_in, H), lambda b, t: (0, 0)),
            pl.BlockSpec((H, F_out), lambda b, t: (0, 0)),
        ],
        out_specs=pl.BlockSpec((t_blk, b_blk, F_out), lambda b, t: (t, b, 0)),
        scratch_shapes=[
            pltpu.VMEM((b_blk, H), jnp.float32),        # v1 (persistent)
            pltpu.VMEM((b_blk, F_out), jnp.float32),    # v2 (persistent)
            pltpu.VMEM((t_blk, b_blk, H), jnp.float32),  # hoisted layer-1 currents
        ],
    )

    return pl.pallas_call(
        kernel,
        out_shape=jax.ShapeDtypeStruct((T, B, F_out), jnp.float32),
        grid_spec=grid_spec,
        compiler_params=pltpu.CompilerParams(
            # batch tiles are independent (megacore on v7x); time carries
            # neuron state and must run sequentially.
            dimension_semantics=("parallel", "arbitrary"),
            vmem_limit_bytes=32 * 1024 * 1024,
        ),
    )(x, w1, w2)


def spiking_sequential_reference(x, w1, w2):
    """Pure-JAX reference of the same time-looped 2-layer LIF network
    (bf16 MXU operands, f32 state math — identical numerics to the kernel)."""
    T, B, _ = x.shape
    H = w1.shape[1]
    F_out = w2.shape[1]
    w1b = w1.astype(jnp.bfloat16)
    w2b = w2.astype(jnp.bfloat16)

    def step(carry, x_t):
        v1, v2 = carry
        i1 = jnp.dot(x_t.astype(jnp.bfloat16), w1b,
                     preferred_element_type=jnp.float32)
        v1 = DECAY * v1 + i1
        f1 = v1 >= THRESH
        s1 = jnp.where(f1, 1.0, 0.0)
        v1 = jnp.where(f1, 0.0, v1)

        i2 = jnp.dot(s1.astype(jnp.bfloat16), w2b,
                     preferred_element_type=jnp.float32)
        v2 = DECAY * v2 + i2
        f2 = v2 >= THRESH
        s2 = jnp.where(f2, 1.0, 0.0)
        v2 = jnp.where(f2, 0.0, v2)
        return (v1, v2), s2

    init = (jnp.zeros((B, H), jnp.float32), jnp.zeros((B, F_out), jnp.float32))
    _, out = jax.lax.scan(step, init, x)
    return out


if __name__ == "__main__":
    # Small, lane-dense shapes: time=16 (2 blocks of 8), batch=8, features=128.
    T, B, F_IN, HID, F_OUT = 16, 8, 128, 128, 128
    T_BLK = 8

    key = jax.random.PRNGKey(0)
    kx, kw1, kw2 = jax.random.split(key, 3)

    # Binary spike-train input (time, batch, features).
    x = jax.random.bernoulli(kx, p=0.3, shape=(T, B, F_IN)).astype(jnp.float32)

    # Deterministic synapse weights, stored as (in, out) = W^T of F.linear weight.
    w1 = (jax.random.normal(kw1, (F_IN, HID), jnp.float32) * 0.15).astype(jnp.bfloat16)
    w2 = (jax.random.normal(kw2, (HID, F_OUT), jnp.float32) * 0.15).astype(jnp.bfloat16)

    out = spiking_sequential_forward(x, w1, w2, t_blk=T_BLK)
    out = jax.block_until_ready(out)

    ref = spiking_sequential_reference(x, w1, w2)
    ref = jax.block_until_ready(ref)

    assert out.shape == (T, B, F_OUT)
    assert jnp.allclose(out, ref, atol=1e-5), "Pallas output mismatch vs reference"

    print("KERNEL_OK")
</pallas_src>

<mosaic_0001>
module attributes {stable_mosaic.version = 11 : i64} {
  func.func @kernel(%arg0: i32, %arg1: i32, %arg2: memref<8x8x128xf32, #tpu.memory_space<vmem>>, %arg3: memref<128x128xbf16, #tpu.memory_space<vmem>>, %arg4: memref<128x128xbf16, #tpu.memory_space<vmem>>, %arg5: memref<8x8x128xf32, #tpu.memory_space<vmem>>, %arg6: memref<8x128xf32, #tpu.memory_space<vmem>>, %arg7: memref<8x128xf32, #tpu.memory_space<vmem>>, %arg8: memref<8x8x128xf32, #tpu.memory_space<vmem>>) attributes {dimension_semantics = [#tpu.dimension_semantics<parallel>, #tpu.dimension_semantics<arbitrary>], iteration_bounds = array<i64: 1, 2>, scalar_prefetch = 0 : i64, scratch_operands = 3 : i64, tpu.core_type = #tpu.core_type<tc>, window_params = [{transform_indices = @transform_0, window_bounds = array<i64: 8, 8, 128>}, {pipeline_mode = #tpu.pipeline_mode<synchronous>, transform_indices = @transform_1, window_bounds = array<i64: 128, 128>}, {pipeline_mode = #tpu.pipeline_mode<synchronous>, transform_indices = @transform_2, window_bounds = array<i64: 128, 128>}, {transform_indices = @transform_3, window_bounds = array<i64: 8, 8, 128>}]} {
    %c0_i32 = arith.constant 0 : i32
    %0 = arith.cmpi eq, %arg1, %c0_i32 : i32
    %1 = arith.extui %0 : i1 to i32
    %c0_i32_0 = arith.constant 0 : i32
    %2 = arith.cmpi ne, %1, %c0_i32_0 : i32
    scf.if %2 {
      %cst_209 = arith.constant 0.000000e+00 : f32
      %282 = vector.broadcast %cst_209 : f32 to vector<8x128xf32>
      %c0_210 = arith.constant 0 : index
      %c0_211 = arith.constant 0 : index
      %283 = vector.load %arg6[%c0_210, %c0_211] : memref<8x128xf32, #tpu.memory_space<vmem>>, vector<8x128xf32>
      tpu.vector_store %arg6[%c0_210, %c0_211], %282 {strides = array<i32>} : memref<8x128xf32, #tpu.memory_space<vmem>>, vector<8x128xf32>,
      %cst_212 = arith.constant 0.000000e+00 : f32
      %284 = vector.broadcast %cst_212 : f32 to vector<8x128xf32>
      %c0_213 = arith.constant 0 : index
      %c0_214 = arith.constant 0 : index
      %285 = vector.load %arg7[%c0_213, %c0_214] : memref<8x128xf32, #tpu.memory_space<vmem>>, vector<8x128xf32>
      tpu.vector_store %arg7[%c0_213, %c0_214], %284 {strides = array<i32>} : memref<8x128xf32, #tpu.memory_space<vmem>>, vector<8x128xf32>,
    } else {
    }
    %c0 = arith.constant 0 : index
    %c0_1 = arith.constant 0 : index
    %c0_2 = arith.constant 0 : index
    %3 = vector.load %arg2[%c0, %c0_1, %c0_2] : memref<8x8x128xf32, #tpu.memory_space<vmem>>, vector<8x8x128xf32>
    %4 = vector.shape_cast %3 : vector<8x8x128xf32> to vector<64x128xf32>
    %5 = arith.truncf %4 : vector<64x128xf32> to vector<64x128xbf16>
    %c0_3 = arith.constant 0 : index
    %c0_4 = arith.constant 0 : index
    %6 = vector.load %arg3[%c0_3, %c0_4] : memref<128x128xbf16, #tpu.memory_space<vmem>>, vector<128x128xbf16>
    %cst = arith.constant dense<0.000000e+00> : vector<64x128xf32>
    %7 = tpu.matmul %5, %6, %cst {dimension_numbers = #tpu.dot_dimension_numbers<[1], [0], [0], [1], [0, 0, 1, 1], [], []>} : vector<64x128xbf16>, vector<128x128xbf16>, vector<64x128xf32> -> vector<64x128xf32>
    %8 = vector.shape_cast %7 : vector<64x128xf32> to vector<8x8x128xf32>
    %c0_5 = arith.constant 0 : index
    %c0_6 = arith.constant 0 : index
    %c0_7 = arith.constant 0 : index
    %9 = vector.load %arg8[%c0_5, %c0_6, %c0_7] : memref<8x8x128xf32, #tpu.memory_space<vmem>>, vector<8x8x128xf32>
    tpu.vector_store %arg8[%c0_5, %c0_6, %c0_7], %8 {strides = array<i32>} : memref<8x8x128xf32, #tpu.memory_space<vmem>>, vector<8x8x128xf32>,
    %c0_i32_8 = arith.constant 0 : i32
    %c0_9 = arith.constant 0 : index
    %c0_10 = arith.constant 0 : index
    %10 = vector.load %arg6[%c0_9, %c0_10] : memref<8x128xf32, #tpu.memory_space<vmem>>, vector<8x128xf32>
    %cst_11 = arith.constant 0.899999976 : f32
    %11 = vector.broadcast %cst_11 : f32 to vector<8x128xf32>
    %12 = arith.mulf %11, %10 : vector<8x128xf32>
    %13 = arith.index_cast %c0_i32_8 : i32 to index
    %c0_12 = arith.constant 0 : index
    %c0_13 = arith.constant 0 : index
    %14 = vector.load %arg8[%13, %c0_12, %c0_13] : memref<8x8x128xf32, #tpu.memory_space<vmem>>, vector<1x8x128xf32>
    %15 = vector.shape_cast %14 : vector<1x8x128xf32> to vector<8x128xf32>
    %16 = arith.addf %12, %15 : vector<8x128xf32>
    %cst_14 = arith.constant 1.000000e+00 : f32
    %17 = vector.broadcast %cst_14 : f32 to vector<8x128xf32>
    %18 = arith.cmpf oge, %16, %17 : vector<8x128xf32>
    %cst_15 = arith.constant 1.000000e+00 : f32
    %cst_16 = arith.constant 0.000000e+00 : f32
    %19 = vector.broadcast %cst_15 : f32 to vector<8x128xf32>
    %20 = vector.broadcast %cst_16 : f32 to vector<8x128xf32>
    %21 = arith.select %18, %19, %20 : vector<8x128xi1>, vector<8x128xf32>
    %cst_17 = arith.constant 0.000000e+00 : f32
    %22 = vector.broadcast %cst_17 : f32 to vector<8x128xf32>
    %23 = arith.select %18, %22, %16 : vector<8x128xi1>, vector<8x128xf32>
    %c0_18 = arith.constant 0 : index
    %c0_19 = arith.constant 0 : index
    %24 = vector.load %arg6[%c0_18, %c0_19] : memref<8x128xf32, #tpu.memory_space<vmem>>, vector<8x128xf32>
    tpu.vector_store %arg6[%c0_18, %c0_19], %23 {strides = array<i32>} : memref<8x128xf32, #tpu.memory_space<vmem>>, vector<8x128xf32>,
    %25 = arith.truncf %21 : vector<8x128xf32> to vector<8x128xbf16>
    %c0_20 = arith.constant 0 : index
    %c0_21 = arith.constant 0 : index
    %26 = vector.load %arg4[%c0_20, %c0_21] : memref<128x128xbf16, #tpu.memory_space<vmem>>, vector<128x128xbf16>
    %cst_22 = arith.constant dense<0.000000e+00> : vector<8x128xf32>
    %27 = tpu.matmul %25, %26, %cst_22 {dimension_numbers = #tpu.dot_dimension_numbers<[1], [0], [0], [1], [0, 0, 1, 1], [], []>} : vector<8x128xbf16>, vector<128x128xbf16>, vector<8x128xf32> -> vector<8x128xf32>
    %c0_23 = arith.constant 0 : index
    %c0_24 = arith.constant 0 : index
    %28 = vector.load %arg7[%c0_23, %c0_24] : memref<8x128xf32, #tpu.memory_space<vmem>>, vector<8x128xf32>
    %cst_25 = arith.constant 0.899999976 : f32
    %29 = vector.broadcast %cst_25 : f32 to vector<8x128xf32>
    %30 = arith.mulf %29, %28 : vector<8x128xf32>
    %31 = arith.addf %30, %27 : vector<8x128xf32>
    %cst_26 = arith.constant 1.000000e+00 : f32
    %32 = vector.broadcast %cst_26 : f32 to vector<8x128xf32>
    %33 = arith.cmpf oge, %31, %32 : vector<8x128xf32>
    %cst_27 = arith.constant 1.000000e+00 : f32
    %cst_28 = arith.constant 0.000000e+00 : f32
    %34 = vector.broadcast %cst_27 : f32 to vector<8x128xf32>
    %35 = vector.broadcast %cst_28 : f32 to vector<8x128xf32>
    %36 = arith.select %33, %34, %35 : vector<8x128xi1>, vector<8x128xf32>
    %37 = arith.index_cast %c0_i32_8 : i32 to index
    %c0_29 = arith.constant 0 : index
    %c0_30 = arith.constant 0 : index
    %38 = vector.load %arg5[%37, %c0_29, %c0_30] : memref<8x8x128xf32, #tpu.memory_space<vmem>>, vector<1x8x128xf32>
    %39 = vector.shape_cast %38 : vector<1x8x128xf32> to vector<8x128xf32>
    %40 = vector.shape_cast %36 : vector<8x128xf32> to vector<1x8x128xf32>
    tpu.vector_store %arg5[%37, %c0_29, %c0_30], %40 {strides = array<i32>} : memref<8x8x128xf32, #tpu.memory_space<vmem>>, vector<1x8x128xf32>,
    %cst_31 = arith.constant 0.000000e+00 : f32
    %41 = vector.broadcast %cst_31 : f32 to vector<8x128xf32>
    %42 = arith.select %33, %41, %31 : vector<8x128xi1>, vector<8x128xf32>
    %c0_32 = arith.constant 0 : index
    %c0_33 = arith.constant 0 : index
    %43 = vector.load %arg7[%c0_32, %c0_33] : memref<8x128xf32, #tpu.memory_space<vmem>>, vector<8x128xf32>
    tpu.vector_store %arg7[%c0_32, %c0_33], %42 {strides = array<i32>} : memref<8x128xf32, #tpu.memory_space<vmem>>, vector<8x128xf32>,
    %c1_i32 = arith.constant 1 : i32
    %c0_34 = arith.constant 0 : index
    %c0_35 = arith.constant 0 : index
    %44 = vector.load %arg6[%c0_34, %c0_35] : memref<8x128xf32, #tpu.memory_space<vmem>>, vector<8x128xf32>
    %cst_36 = arith.constant 0.899999976 : f32
    %45 = vector.broadcast %cst_36 : f32 to vector<8x128xf32>
    %46 = arith.mulf %45, %44 : vector<8x128xf32>
    %47 = arith.index_cast %c1_i32 : i32 to index
    %c0_37 = arith.constant 0 : index
    %c0_38 = arith.constant 0 : index
    %48 = vector.load %arg8[%47, %c0_37, %c0_38] : memref<8x8x128xf32, #tpu.memory_space<vmem>>, vector<1x8x128xf32>
    %49 = vector.shape_cast %48 : vector<1x8x128xf32> to vector<8x128xf32>
    %50 = arith.addf %46, %49 : vector<8x128xf32>
    %cst_39 = arith.constant 1.000000e+00 : f32
    %51 = vector.broadcast %cst_39 : f32 to vector<8x128xf32>
    %52 = arith.cmpf oge, %50, %51 : vector<8x128xf32>
    %cst_40 = arith.constant 1.000000e+00 : f32
    %cst_41 = arith.constant 0.000000e+00 : f32
    %53 = vector.broadcast %cst_40 : f32 to vector<8x128xf32>
    %54 = vector.broadcast %cst_41 : f32 to vector<8x128xf32>
    %55 = arith.select %52, %53, %54 : vector<8x128xi1>, vector<8x128xf32>
    %cst_42 = arith.constant 0.000000e+00 : f32
    %56 = vector.broadcast %cst_42 : f32 to vector<8x128xf32>
    %57 = arith.select %52, %56, %50 : vector<8x128xi1>, vector<8x128xf32>
    %c0_43 = arith.constant 0 : index
    %c0_44 = arith.constant 0 : index
    %58 = vector.load %arg6[%c0_43, %c0_44] : memref<8x128xf32, #tpu.memory_space<vmem>>, vector<8x128xf32>
    tpu.vector_store %arg6[%c0_43, %c0_44], %57 {strides = array<i32>} : memref<8x128xf32, #tpu.memory_space<vmem>>, vector<8x128xf32>,
    %59 = arith.truncf %55 : vector<8x128xf32> to vector<8x128xbf16>
    %c0_45 = arith.constant 0 : index
    %c0_46 = arith.constant 0 : index
    %60 = vector.load %arg4[%c0_45, %c0_46] : memref<128x128xbf16, #tpu.memory_space<vmem>>, vector<128x128xbf16>
    %cst_47 = arith.constant dense<0.000000e+00> : vector<8x128xf32>
    %61 = tpu.matmul %59, %60, %cst_47 {dimension_numbers = #tpu.dot_dimension_numbers<[1], [0], [0], [1], [0, 0, 1, 1], [], []>} : vector<8x128xbf16>, vector<128x128xbf16>, vector<8x128xf32> -> vector<8x128xf32>
    %c0_48 = arith.constant 0 : index
    %c0_49 = arith.constant 0 : index
    %62 = vector.load %arg7[%c0_48, %c0_49] : memref<8x128xf32, #tpu.memory_space<vmem>>, vector<8x128xf32>
    %cst_50 = arith.constant 0.899999976 : f32
    %63 = vector.broadcast %cst_50 : f32 to vector<8x128xf32>
    %64 = arith.mulf %63, %62 : vector<8x128xf32>
    %65 = arith.addf %64, %61 : vector<8x128xf32>
    %cst_51 = arith.constant 1.000000e+00 : f32
    %66 = vector.broadcast %cst_51 : f32 to vector<8x128xf32>
    %67 = arith.cmpf oge, %65, %66 : vector<8x128xf32>
    %cst_52 = arith.constant 1.000000e+00 : f32
    %cst_53 = arith.constant 0.000000e+00 : f32
    %68 = vector.broadcast %cst_52 : f32 to vector<8x128xf32>
    %69 = vector.broadcast %cst_53 : f32 to vector<8x128xf32>
    %70 = arith.select %67, %68, %69 : vector<8x128xi1>, vector<8x128xf32>
    %71 = arith.index_cast %c1_i32 : i32 to index
    %c0_54 = arith.constant 0 : index
    %c0_55 = arith.constant 0 : index
    %72 = vector.load %arg5[%71, %c0_54, %c0_55] : memref<8x8x128xf32, #tpu.memory_space<vmem>>, vector<1x8x128xf32>
    %73 = vector.shape_cast %72 : vector<1x8x128xf32> to vector<8x128xf32>
    %74 = vector.shape_cast %70 : vector<8x128xf32> to vector<1x8x128xf32>
    tpu.vector_store %arg5[%71, %c0_54, %c0_55], %74 {strides = array<i32>} : memref<8x8x128xf32, #tpu.memory_space<vmem>>, vector<1x8x128xf32>,
    %cst_56 = arith.constant 0.000000e+00 : f32
    %75 = vector.broadcast %cst_56 : f32 to vector<8x128xf32>
    %76 = arith.select %67, %75, %65 : vector<8x128xi1>, vector<8x128xf32>
    %c0_57 = arith.constant 0 : index
    %c0_58 = arith.constant 0 : index
    %77 = vector.load %arg7[%c0_57, %c0_58] : memref<8x128xf32, #tpu.memory_space<vmem>>, vector<8x128xf32>
    tpu.vector_store %arg7[%c0_57, %c0_58], %76 {strides = array<i32>} : memref<8x128xf32, #tpu.memory_space<vmem>>, vector<8x128xf32>,
    %c2_i32 = arith.constant 2 : i32
    %c0_59 = arith.constant 0 : index
    %c0_60 = arith.constant 0 : index
    %78 = vector.load %arg6[%c0_59, %c0_60] : memref<8x128xf32, #tpu.memory_space<vmem>>, vector<8x128xf32>
    %cst_61 = arith.constant 0.899999976 : f32
    %79 = vector.broadcast %cst_61 : f32 to vector<8x128xf32>
    %80 = arith.mulf %79, %78 : vector<8x128xf32>
    %81 = arith.index_cast %c2_i32 : i32 to index
    %c0_62 = arith.constant 0 : index
    %c0_63 = arith.constant 0 : index
    %82 = vector.load %arg8[%81, %c0_62, %c0_63] : memref<8x8x128xf32, #tpu.memory_space<vmem>>, vector<1x8x128xf32>
    %83 = vector.shape_cast %82 : vector<1x8x128xf32> to vector<8x128xf32>
    %84 = arith.addf %80, %83 : vector<8x128xf32>
    %cst_64 = arith.constant 1.000000e+00 : f32
    %85 = vector.broadcast %cst_64 : f32 to vector<8x128xf32>
    %86 = arith.cmpf oge, %84, %85 : vector<8x128xf32>
    %cst_65 = arith.constant 1.000000e+00 : f32
    %cst_66 = arith.constant 0.000000e+00 : f32
    %87 = vector.broadcast %cst_65 : f32 to vector<8x128xf32>
    %88 = vector.broadcast %cst_66 : f32 to vector<8x128xf32>
    %89 = arith.select %86, %87, %88 : vector<8x128xi1>, vector<8x128xf32>
    %cst_67 = arith.constant 0.000000e+00 : f32
    %90 = vector.broadcast %cst_67 : f32 to vector<8x128xf32>
    %91 = arith.select %86, %90, %84 : vector<8x128xi1>, vector<8x128xf32>
    %c0_68 = arith.constant 0 : index
    %c0_69 = arith.constant 0 : index
    %92 = vector.load %arg6[%c0_68, %c0_69] : memref<8x128xf32, #tpu.memory_space<vmem>>, vector<8x128xf32>
    tpu.vector_store %arg6[%c0_68, %c0_69], %91 {strides = array<i32>} : memref<8x128xf32, #tpu.memory_space<vmem>>, vector<8x128xf32>,
    %93 = arith.truncf %89 : vector<8x128xf32> to vector<8x128xbf16>
    %c0_70 = arith.constant 0 : index
    %c0_71 = arith.constant 0 : index
    %94 = vector.load %arg4[%c0_70, %c0_71] : memref<128x128xbf16, #tpu.memory_space<vmem>>, vector<128x128xbf16>
    %cst_72 = arith.constant dense<0.000000e+00> : vector<8x128xf32>
    %95 = tpu.matmul %93, %94, %cst_72 {dimension_numbers = #tpu.dot_dimension_numbers<[1], [0], [0], [1], [0, 0, 1, 1], [], []>} : vector<8x128xbf16>, vector<128x128xbf16>, vector<8x128xf32> -> vector<8x128xf32>
    %c0_73 = arith.constant 0 : index
    %c0_74 = arith.constant 0 : index
    %96 = vector.load %arg7[%c0_73, %c0_74] : memref<8x128xf32, #tpu.memory_space<vmem>>, vector<8x128xf32>
    %cst_75 = arith.constant 0.899999976 : f32
    %97 = vector.broadcast %cst_75 : f32 to vector<8x128xf32>
    %98 = arith.mulf %97, %96 : vector<8x128xf32>
    %99 = arith.addf %98, %95 : vector<8x128xf32>
    %cst_76 = arith.constant 1.000000e+00 : f32
    %100 = vector.broadcast %cst_76 : f32 to vector<8x128xf32>
    %101 = arith.cmpf oge, %99, %100 : vector<8x128xf32>
    %cst_77 = arith.constant 1.000000e+00 : f32
    %cst_78 = arith.constant 0.000000e+00 : f32
    %102 = vector.broadcast %cst_77 : f32 to vector<8x128xf32>
    %103 = vector.broadcast %cst_78 : f32 to vector<8x128xf32>
    %104 = arith.select %101, %102, %103 : vector<8x128xi1>, vector<8x128xf32>
    %105 = arith.index_cast %c2_i32 : i32 to index
    %c0_79 = arith.constant 0 : index
    %c0_80 = arith.constant 0 : index
    %106 = vector.load %arg5[%105, %c0_79, %c0_80] : memref<8x8x128xf32, #tpu.memory_space<vmem>>, vector<1x8x128xf32>
    %107 = vector.shape_cast %106 : vector<1x8x128xf32> to vector<8x128xf32>
    %108 = vector.shape_cast %104 : vector<8x128xf32> to vector<1x8x128xf32>
    tpu.vector_store %arg5[%105, %c0_79, %c0_80], %108 {strides = array<i32>} : memref<8x8x128xf32, #tpu.memory_space<vmem>>, vector<1x8x128xf32>,
    %cst_81 = arith.constant 0.000000e+00 : f32
    %109 = vector.broadcast %cst_81 : f32 to vector<8x128xf32>
    %110 = arith.select %101, %109, %99 : vector<8x128xi1>, vector<8x128xf32>
    %c0_82 = arith.constant 0 : index
    %c0_83 = arith.constant 0 : index
    %111 = vector.load %arg7[%c0_82, %c0_83] : memref<8x128xf32, #tpu.memory_space<vmem>>, vector<8x128xf32>
    tpu.vector_store %arg7[%c0_82, %c0_83], %110 {strides = array<i32>} : memref<8x128xf32, #tpu.memory_space<vmem>>, vector<8x128xf32>,
    %c3_i32 = arith.constant 3 : i32
    %c0_84 = arith.constant 0 : index
    %c0_85 = arith.constant 0 : index
    %112 = vector.load %arg6[%c0_84, %c0_85] : memref<8x128xf32, #tpu.memory_space<vmem>>, vector<8x128xf32>
    %cst_86 = arith.constant 0.899999976 : f32
    %113 = vector.broadcast %cst_86 : f32 to vector<8x128xf32>
    %114 = arith.mulf %113, %112 : vector<8x128xf32>
    %115 = arith.index_cast %c3_i32 : i32 to index
    %c0_87 = arith.constant 0 : index
    %c0_88 = arith.constant 0 : index
    %116 = vector.load %arg8[%115, %c0_87, %c0_88] : memref<8x8x128xf32, #tpu.memory_space<vmem>>, vector<1x8x128xf32>
    %117 = vector.shape_cast %116 : vector<1x8x128xf32> to vector<8x128xf32>
    %118 = arith.addf %114, %117 : vector<8x128xf32>
    %cst_89 = arith.constant 1.000000e+00 : f32
    %119 = vector.broadcast %cst_89 : f32 to vector<8x128xf32>
    %120 = arith.cmpf oge, %118, %119 : vector<8x128xf32>
    %cst_90 = arith.constant 1.000000e+00 : f32
    %cst_91 = arith.constant 0.000000e+00 : f32
    %121 = vector.broadcast %cst_90 : f32 to vector<8x128xf32>
    %122 = vector.broadcast %cst_91 : f32 to vector<8x128xf32>
    %123 = arith.select %120, %121, %122 : vector<8x128xi1>, vector<8x128xf32>
    %cst_92 = arith.constant 0.000000e+00 : f32
    %124 = vector.broadcast %cst_92 : f32 to vector<8x128xf32>
    %125 = arith.select %120, %124, %118 : vector<8x128xi1>, vector<8x128xf32>
    %c0_93 = arith.constant 0 : index
    %c0_94 = arith.constant 0 : index
    %126 = vector.load %arg6[%c0_93, %c0_94] : memref<8x128xf32, #tpu.memory_space<vmem>>, vector<8x128xf32>
    tpu.vector_store %arg6[%c0_93, %c0_94], %125 {strides = array<i32>} : memref<8x128xf32, #tpu.memory_space<vmem>>, vector<8x128xf32>,
    %127 = arith.truncf %123 : vector<8x128xf32> to vector<8x128xbf16>
    %c0_95 = arith.constant 0 : index
    %c0_96 = arith.constant 0 : index
    %128 = vector.load %arg4[%c0_95, %c0_96] : memref<128x128xbf16, #tpu.memory_space<vmem>>, vector<128x128xbf16>
    %cst_97 = arith.constant dense<0.000000e+00> : vector<8x128xf32>
    %129 = tpu.matmul %127, %128, %cst_97 {dimension_numbers = #tpu.dot_dimension_numbers<[1], [0], [0], [1], [0, 0, 1, 1], [], []>} : vector<8x128xbf16>, vector<128x128xbf16>, vector<8x128xf32> -> vector<8x128xf32>
    %c0_98 = arith.constant 0 : index
    %c0_99 = arith.constant 0 : index
    %130 = vector.load %arg7[%c0_98, %c0_99] : memref<8x128xf32, #tpu.memory_space<vmem>>, vector<8x128xf32>
    %cst_100 = arith.constant 0.899999976 : f32
    %131 = vector.broadcast %cst_100 : f32 to vector<8x128xf32>
    %132 = arith.mulf %131, %130 : vector<8x128xf32>
    %133 = arith.addf %132, %129 : vector<8x128xf32>
    %cst_101 = arith.constant 1.000000e+00 : f32
    %134 = vector.broadcast %cst_101 : f32 to vector<8x128xf32>
    %135 = arith.cmpf oge, %133, %134 : vector<8x128xf32>
    %cst_102 = arith.constant 1.000000e+00 : f32
    %cst_103 = arith.constant 0.000000e+00 : f32
    %136 = vector.broadcast %cst_102 : f32 to vector<8x128xf32>
    %137 = vector.broadcast %cst_103 : f32 to vector<8x128xf32>
    %138 = arith.select %135, %136, %137 : vector<8x128xi1>, vector<8x128xf32>
    %139 = arith.index_cast %c3_i32 : i32 to index
    %c0_104 = arith.constant 0 : index
    %c0_105 = arith.constant 0 : index
    %140 = vector.load %arg5[%139, %c0_104, %c0_105] : memref<8x8x128xf32, #tpu.memory_space<vmem>>, vector<1x8x128xf32>
    %141 = vector.shape_cast %140 : vector<1x8x128xf32> to vector<8x128xf32>
    %142 = vector.shape_cast %138 : vector<8x128xf32> to vector<1x8x128xf32>
    tpu.vector_store %arg5[%139, %c0_104, %c0_105], %142 {strides = array<i32>} : memref<8x8x128xf32, #tpu.memory_space<vmem>>, vector<1x8x128xf32>,
    %cst_106 = arith.constant 0.000000e+00 : f32
    %143 = vector.broadcast %cst_106 : f32 to vector<8x128xf32>
    %144 = arith.select %135, %143, %133 : vector<8x128xi1>, vector<8x128xf32>
    %c0_107 = arith.constant 0 : index
    %c0_108 = arith.constant 0 : index
    %145 = vector.load %arg7[%c0_107, %c0_108] : memref<8x128xf32, #tpu.memory_space<vmem>>, vector<8x128xf32>
    tpu.vector_store %arg7[%c0_107, %c0_108], %144 {strides = array<i32>} : memref<8x128xf32, #tpu.memory_space<vmem>>, vector<8x128xf32>,
    %c4_i32 = arith.constant 4 : i32
    %c0_109 = arith.constant 0 : index
    %c0_110 = arith.constant 0 : index
    %146 = vector.load %arg6[%c0_109, %c0_110] : memref<8x128xf32, #tpu.memory_space<vmem>>, vector<8x128xf32>
    %cst_111 = arith.constant 0.899999976 : f32
    %147 = vector.broadcast %cst_111 : f32 to vector<8x128xf32>
    %148 = arith.mulf %147, %146 : vector<8x128xf32>
    %149 = arith.index_cast %c4_i32 : i32 to index
    %c0_112 = arith.constant 0 : index
    %c0_113 = arith.constant 0 : index
    %150 = vector.load %arg8[%149, %c0_112, %c0_113] : memref<8x8x128xf32, #tpu.memory_space<vmem>>, vector<1x8x128xf32>
    %151 = vector.shape_cast %150 : vector<1x8x128xf32> to vector<8x128xf32>
    %152 = arith.addf %148, %151 : vector<8x128xf32>
    %cst_114 = arith.constant 1.000000e+00 : f32
    %153 = vector.broadcast %cst_114 : f32 to vector<8x128xf32>
    %154 = arith.cmpf oge, %152, %153 : vector<8x128xf32>
    %cst_115 = arith.constant 1.000000e+00 : f32
    %cst_116 = arith.constant 0.000000e+00 : f32
    %155 = vector.broadcast %cst_115 : f32 to vector<8x128xf32>
    %156 = vector.broadcast %cst_116 : f32 to vector<8x128xf32>
    %157 = arith.select %154, %155, %156 : vector<8x128xi1>, vector<8x128xf32>
    %cst_117 = arith.constant 0.000000e+00 : f32
    %158 = vector.broadcast %cst_117 : f32 to vector<8x128xf32>
    %159 = arith.select %154, %158, %152 : vector<8x128xi1>, vector<8x128xf32>
    %c0_118 = arith.constant 0 : index
    %c0_119 = arith.constant 0 : index
    %160 = vector.load %arg6[%c0_118, %c0_119] : memref<8x128xf32, #tpu.memory_space<vmem>>, vector<8x128xf32>
    tpu.vector_store %arg6[%c0_118, %c0_119], %159 {strides = array<i32>} : memref<8x128xf32, #tpu.memory_space<vmem>>, vector<8x128xf32>,
    %161 = arith.truncf %157 : vector<8x128xf32> to vector<8x128xbf16>
    %c0_120 = arith.constant 0 : index
    %c0_121 = arith.constant 0 : index
    %162 = vector.load %arg4[%c0_120, %c0_121] : memref<128x128xbf16, #tpu.memory_space<vmem>>, vector<128x128xbf16>
    %cst_122 = arith.constant dense<0.000000e+00> : vector<8x128xf32>
    %163 = tpu.matmul %161, %162, %cst_122 {dimension_numbers = #tpu.dot_dimension_numbers<[1], [0], [0], [1], [0, 0, 1, 1], [], []>} : vector<8x128xbf16>, vector<128x128xbf16>, vector<8x128xf32> -> vector<8x128xf32>
    %c0_123 = arith.constant 0 : index
    %c0_124 = arith.constant 0 : index
    %164 = vector.load %arg7[%c0_123, %c0_124] : memref<8x128xf32, #tpu.memory_space<vmem>>, vector<8x128xf32>
    %cst_125 = arith.constant 0.899999976 : f32
    %165 = vector.broadcast %cst_125 : f32 to vector<8x128xf32>
    %166 = arith.mulf %165, %164 : vector<8x128xf32>
    %167 = arith.addf %166, %163 : vector<8x128xf32>
    %cst_126 = arith.constant 1.000000e+00 : f32
    %168 = vector.broadcast %cst_126 : f32 to vector<8x128xf32>
    %169 = arith.cmpf oge, %167, %168 : vector<8x128xf32>
    %cst_127 = arith.constant 1.000000e+00 : f32
    %cst_128 = arith.constant 0.000000e+00 : f32
    %170 = vector.broadcast %cst_127 : f32 to vector<8x128xf32>
    %171 = vector.broadcast %cst_128 : f32 to vector<8x128xf32>
    %172 = arith.select %169, %170, %171 : vector<8x128xi1>, vector<8x128xf32>
    %173 = arith.index_cast %c4_i32 : i32 to index
    %c0_129 = arith.constant 0 : index
    %c0_130 = arith.constant 0 : index
    %174 = vector.load %arg5[%173, %c0_129, %c0_130] : memref<8x8x128xf32, #tpu.memory_space<vmem>>, vector<1x8x128xf32>
    %175 = vector.shape_cast %174 : vector<1x8x128xf32> to vector<8x128xf32>
    %176 = vector.shape_cast %172 : vector<8x128xf32> to vector<1x8x128xf32>
    tpu.vector_store %arg5[%173, %c0_129, %c0_130], %176 {strides = array<i32>} : memref<8x8x128xf32, #tpu.memory_space<vmem>>, vector<1x8x128xf32>,
    %cst_131 = arith.constant 0.000000e+00 : f32
    %177 = vector.broadcast %cst_131 : f32 to vector<8x128xf32>
    %178 = arith.select %169, %177, %167 : vector<8x128xi1>, vector<8x128xf32>
    %c0_132 = arith.constant 0 : index
    %c0_133 = arith.constant 0 : index
    %179 = vector.load %arg7[%c0_132, %c0_133] : memref<8x128xf32, #tpu.memory_space<vmem>>, vector<8x128xf32>
    tpu.vector_store %arg7[%c0_132, %c0_133], %178 {strides = array<i32>} : memref<8x128xf32, #tpu.memory_space<vmem>>, vector<8x128xf32>,
    %c5_i32 = arith.constant 5 : i32
    %c0_134 = arith.constant 0 : index
    %c0_135 = arith.constant 0 : index
    %180 = vector.load %arg6[%c0_134, %c0_135] : memref<8x128xf32, #tpu.memory_space<vmem>>, vector<8x128xf32>
    %cst_136 = arith.constant 0.899999976 : f32
    %181 = vector.broadcast %cst_136 : f32 to vector<8x128xf32>
    %182 = arith.mulf %181, %180 : vector<8x128xf32>
    %183 = arith.index_cast %c5_i32 : i32 to index
    %c0_137 = arith.constant 0 : index
    %c0_138 = arith.constant 0 : index
    %184 = vector.load %arg8[%183, %c0_137, %c0_138] : memref<8x8x128xf32, #tpu.memory_space<vmem>>, vector<1x8x128xf32>
    %185 = vector.shape_cast %184 : vector<1x8x128xf32> to vector<8x128xf32>
    %186 = arith.addf %182, %185 : vector<8x128xf32>
    %cst_139 = arith.constant 1.000000e+00 : f32
    %187 = vector.broadcast %cst_139 : f32 to vector<8x128xf32>
    %188 = arith.cmpf oge, %186, %187 : vector<8x128xf32>
    %cst_140 = arith.constant 1.000000e+00 : f32
    %cst_141 = arith.constant 0.000000e+00 : f32
    %189 = vector.broadcast %cst_140 : f32 to vector<8x128xf32>
    %190 = vector.broadcast %cst_141 : f32 to vector<8x128xf32>
    %191 = arith.select %188, %189, %190 : vector<8x128xi1>, vector<8x128xf32>
    %cst_142 = arith.constant 0.000000e+00 : f32
    %192 = vector.broadcast %cst_142 : f32 to vector<8x128xf32>
    %193 = arith.select %188, %192, %186 : vector<8x128xi1>, vector<8x128xf32>
    %c0_143 = arith.constant 0 : index
    %c0_144 = arith.constant 0 : index
    %194 = vector.load %arg6[%c0_143, %c0_144] : memref<8x128xf32, #tpu.memory_space<vmem>>, vector<8x128xf32>
    tpu.vector_store %arg6[%c0_143, %c0_144], %193 {strides = array<i32>} : memref<8x128xf32, #tpu.memory_space<vmem>>, vector<8x128xf32>,
    %195 = arith.truncf %191 : vector<8x128xf32> to vector<8x128xbf16>
    %c0_145 = arith.constant 0 : index
    %c0_146 = arith.constant 0 : index
    %196 = vector.load %arg4[%c0_145, %c0_146] : memref<128x128xbf16, #tpu.memory_space<vmem>>, vector<128x128xbf16>
    %cst_147 = arith.constant dense<0.000000e+00> : vector<8x128xf32>
    %197 = tpu.matmul %195, %196, %cst_147 {dimension_numbers = #tpu.dot_dimension_numbers<[1], [0], [0], [1], [0, 0, 1, 1], [], []>} : vector<8x128xbf16>, vector<128x128xbf16>, vector<8x128xf32> -> vector<8x128xf32>
    %c0_148 = arith.constant 0 : index
    %c0_149 = arith.constant 0 : index
    %198 = vector.load %arg7[%c0_148, %c0_149] : memref<8x128xf32, #tpu.memory_space<vmem>>, vector<8x128xf32>
    %cst_150 = arith.constant 0.899999976 : f32
    %199 = vector.broadcast %cst_150 : f32 to vector<8x128xf32>
    %200 = arith.mulf %199, %198 : vector<8x128xf32>
    %201 = arith.addf %200, %197 : vector<8x128xf32>
    %cst_151 = arith.constant 1.000000e+00 : f32
    %202 = vector.broadcast %cst_151 : f32 to vector<8x128xf32>
    %203 = arith.cmpf oge, %201, %202 : vector<8x128xf32>
    %cst_152 = arith.constant 1.000000e+00 : f32
    %cst_153 = arith.constant 0.000000e+00 : f32
    %204 = vector.broadcast %cst_152 : f32 to vector<8x128xf32>
    %205 = vector.broadcast %cst_153 : f32 to vector<8x128xf32>
    %206 = arith.select %203, %204, %205 : vector<8x128xi1>, vector<8x128xf32>
    %207 = arith.index_cast %c5_i32 : i32 to index
    %c0_154 = arith.constant 0 : index
    %c0_155 = arith.constant 0 : index
    %208 = vector.load %arg5[%207, %c0_154, %c0_155] : memref<8x8x128xf32, #tpu.memory_space<vmem>>, vector<1x8x128xf32>
    %209 = vector.shape_cast %208 : vector<1x8x128xf32> to vector<8x128xf32>
    %210 = vector.shape_cast %206 : vector<8x128xf32> to vector<1x8x128xf32>
    tpu.vector_store %arg5[%207, %c0_154, %c0_155], %210 {strides = array<i32>} : memref<8x8x128xf32, #tpu.memory_space<vmem>>, vector<1x8x128xf32>,
    %cst_156 = arith.constant 0.000000e+00 : f32
    %211 = vector.broadcast %cst_156 : f32 to vector<8x128xf32>
    %212 = arith.select %203, %211, %201 : vector<8x128xi1>, vector<8x128xf32>
    %c0_157 = arith.constant 0 : index
    %c0_158 = arith.constant 0 : index
    %213 = vector.load %arg7[%c0_157, %c0_158] : memref<8x128xf32, #tpu.memory_space<vmem>>, vector<8x128xf32>
    tpu.vector_store %arg7[%c0_157, %c0_158], %212 {strides = array<i32>} : memref<8x128xf32, #tpu.memory_space<vmem>>, vector<8x128xf32>,
    %c6_i32 = arith.constant 6 : i32
    %c0_159 = arith.constant 0 : index
    %c0_160 = arith.constant 0 : index
    %214 = vector.load %arg6[%c0_159, %c0_160] : memref<8x128xf32, #tpu.memory_space<vmem>>, vector<8x128xf32>
    %cst_161 = arith.constant 0.899999976 : f32
    %215 = vector.broadcast %cst_161 : f32 to vector<8x128xf32>
    %216 = arith.mulf %215, %214 : vector<8x128xf32>
    %217 = arith.index_cast %c6_i32 : i32 to index
    %c0_162 = arith.constant 0 : index
    %c0_163 = arith.constant 0 : index
    %218 = vector.load %arg8[%217, %c0_162, %c0_163] : memref<8x8x128xf32, #tpu.memory_space<vmem>>, vector<1x8x128xf32>
    %219 = vector.shape_cast %218 : vector<1x8x128xf32> to vector<8x128xf32>
    %220 = arith.addf %216, %219 : vector<8x128xf32>
    %cst_164 = arith.constant 1.000000e+00 : f32
    %221 = vector.broadcast %cst_164 : f32 to vector<8x128xf32>
    %222 = arith.cmpf oge, %220, %221 : vector<8x128xf32>
    %cst_165 = arith.constant 1.000000e+00 : f32
    %cst_166 = arith.constant 0.000000e+00 : f32
    %223 = vector.broadcast %cst_165 : f32 to vector<8x128xf32>
    %224 = vector.broadcast %cst_166 : f32 to vector<8x128xf32>
    %225 = arith.select %222, %223, %224 : vector<8x128xi1>, vector<8x128xf32>
    %cst_167 = arith.constant 0.000000e+00 : f32
    %226 = vector.broadcast %cst_167 : f32 to vector<8x128xf32>
    %227 = arith.select %222, %226, %220 : vector<8x128xi1>, vector<8x128xf32>
    %c0_168 = arith.constant 0 : index
    %c0_169 = arith.constant 0 : index
    %228 = vector.load %arg6[%c0_168, %c0_169] : memref<8x128xf32, #tpu.memory_space<vmem>>, vector<8x128xf32>
    tpu.vector_store %arg6[%c0_168, %c0_169], %227 {strides = array<i32>} : memref<8x128xf32, #tpu.memory_space<vmem>>, vector<8x128xf32>,
    %229 = arith.truncf %225 : vector<8x128xf32> to vector<8x128xbf16>
    %c0_170 = arith.constant 0 : index
    %c0_171 = arith.constant 0 : index
    %230 = vector.load %arg4[%c0_170, %c0_171] : memref<128x128xbf16, #tpu.memory_space<vmem>>, vector<128x128xbf16>
    %cst_172 = arith.constant dense<0.000000e+00> : vector<8x128xf32>
    %231 = tpu.matmul %229, %230, %cst_172 {dimension_numbers = #tpu.dot_dimension_numbers<[1], [0], [0], [1], [0, 0, 1, 1], [], []>} : vector<8x128xbf16>, vector<128x128xbf16>, vector<8x128xf32> -> vector<8x128xf32>
    %c0_173 = arith.constant 0 : index
    %c0_174 = arith.constant 0 : index
    %232 = vector.load %arg7[%c0_173, %c0_174] : memref<8x128xf32, #tpu.memory_space<vmem>>, vector<8x128xf32>
    %cst_175 = arith.constant 0.899999976 : f32
    %233 = vector.broadcast %cst_175 : f32 to vector<8x128xf32>
    %234 = arith.mulf %233, %232 : vector<8x128xf32>
    %235 = arith.addf %234, %231 : vector<8x128xf32>
    %cst_176 = arith.constant 1.000000e+00 : f32
    %236 = vector.broadcast %cst_176 : f32 to vector<8x128xf32>
    %237 = arith.cmpf oge, %235, %236 : vector<8x128xf32>
    %cst_177 = arith.constant 1.000000e+00 : f32
    %cst_178 = arith.constant 0.000000e+00 : f32
    %238 = vector.broadcast %cst_177 : f32 to vector<8x128xf32>
    %239 = vector.broadcast %cst_178 : f32 to vector<8x128xf32>
    %240 = arith.select %237, %238, %239 : vector<8x128xi1>, vector<8x128xf32>
    %241 = arith.index_cast %c6_i32 : i32 to index
    %c0_179 = arith.constant 0 : index
    %c0_180 = arith.constant 0 : index
    %242 = vector.load %arg5[%241, %c0_179, %c0_180] : memref<8x8x128xf32, #tpu.memory_space<vmem>>, vector<1x8x128xf32>
    %243 = vector.shape_cast %242 : vector<1x8x128xf32> to vector<8x128xf32>
    %244 = vector.shape_cast %240 : vector<8x128xf32> to vector<1x8x128xf32>
    tpu.vector_store %arg5[%241, %c0_179, %c0_180], %244 {strides = array<i32>} : memref<8x8x128xf32, #tpu.memory_space<vmem>>, vector<1x8x128xf32>,
    %cst_181 = arith.constant 0.000000e+00 : f32
    %245 = vector.broadcast %cst_181 : f32 to vector<8x128xf32>
    %246 = arith.select %237, %245, %235 : vector<8x128xi1>, vector<8x128xf32>
    %c0_182 = arith.constant 0 : index
    %c0_183 = arith.constant 0 : index
    %247 = vector.load %arg7[%c0_182, %c0_183] : memref<8x128xf32, #tpu.memory_space<vmem>>, vector<8x128xf32>
    tpu.vector_store %arg7[%c0_182, %c0_183], %246 {strides = array<i32>} : memref<8x128xf32, #tpu.memory_space<vmem>>, vector<8x128xf32>,
    %c7_i32 = arith.constant 7 : i32
    %c0_184 = arith.constant 0 : index
    %c0_185 = arith.constant 0 : index
    %248 = vector.load %arg6[%c0_184, %c0_185] : memref<8x128xf32, #tpu.memory_space<vmem>>, vector<8x128xf32>
    %cst_186 = arith.constant 0.899999976 : f32
    %249 = vector.broadcast %cst_186 : f32 to vector<8x128xf32>
    %250 = arith.mulf %249, %248 : vector<8x128xf32>
    %251 = arith.index_cast %c7_i32 : i32 to index
    %c0_187 = arith.constant 0 : index
    %c0_188 = arith.constant 0 : index
    %252 = vector.load %arg8[%251, %c0_187, %c0_188] : memref<8x8x128xf32, #tpu.memory_space<vmem>>, vector<1x8x128xf32>
    %253 = vector.shape_cast %252 : vector<1x8x128xf32> to vector<8x128xf32>
    %254 = arith.addf %250, %253 : vector<8x128xf32>
    %cst_189 = arith.constant 1.000000e+00 : f32
    %255 = vector.broadcast %cst_189 : f32 to vector<8x128xf32>
    %256 = arith.cmpf oge, %254, %255 : vector<8x128xf32>
    %cst_190 = arith.constant 1.000000e+00 : f32
    %cst_191 = arith.constant 0.000000e+00 : f32
    %257 = vector.broadcast %cst_190 : f32 to vector<8x128xf32>
    %258 = vector.broadcast %cst_191 : f32 to vector<8x128xf32>
    %259 = arith.select %256, %257, %258 : vector<8x128xi1>, vector<8x128xf32>
    %cst_192 = arith.constant 0.000000e+00 : f32
    %260 = vector.broadcast %cst_192 : f32 to vector<8x128xf32>
    %261 = arith.select %256, %260, %254 : vector<8x128xi1>, vector<8x128xf32>
    %c0_193 = arith.constant 0 : index
    %c0_194 = arith.constant 0 : index
    %262 = vector.load %arg6[%c0_193, %c0_194] : memref<8x128xf32, #tpu.memory_space<vmem>>, vector<8x128xf32>
    tpu.vector_store %arg6[%c0_193, %c0_194], %261 {strides = array<i32>} : memref<8x128xf32, #tpu.memory_space<vmem>>, vector<8x128xf32>,
    %263 = arith.truncf %259 : vector<8x128xf32> to vector<8x128xbf16>
    %c0_195 = arith.constant 0 : index
    %c0_196 = arith.constant 0 : index
    %264 = vector.load %arg4[%c0_195, %c0_196] : memref<128x128xbf16, #tpu.memory_space<vmem>>, vector<128x128xbf16>
    %cst_197 = arith.constant dense<0.000000e+00> : vector<8x128xf32>
    %265 = tpu.matmul %263, %264, %cst_197 {dimension_numbers = #tpu.dot_dimension_numbers<[1], [0], [0], [1], [0, 0, 1, 1], [], []>} : vector<8x128xbf16>, vector<128x128xbf16>, vector<8x128xf32> -> vector<8x128xf32>
    %c0_198 = arith.constant 0 : index
    %c0_199 = arith.constant 0 : index
    %266 = vector.load %arg7[%c0_198, %c0_199] : memref<8x128xf32, #tpu.memory_space<vmem>>, vector<8x128xf32>
    %cst_200 = arith.constant 0.899999976 : f32
    %267 = vector.broadcast %cst_200 : f32 to vector<8x128xf32>
    %268 = arith.mulf %267, %266 : vector<8x128xf32>
    %269 = arith.addf %268, %265 : vector<8x128xf32>
    %cst_201 = arith.constant 1.000000e+00 : f32
    %270 = vector.broadcast %cst_201 : f32 to vector<8x128xf32>
    %271 = arith.cmpf oge, %269, %270 : vector<8x128xf32>
    %cst_202 = arith.constant 1.000000e+00 : f32
    %cst_203 = arith.constant 0.000000e+00 : f32
    %272 = vector.broadcast %cst_202 : f32 to vector<8x128xf32>
    %273 = vector.broadcast %cst_203 : f32 to vector<8x128xf32>
    %274 = arith.select %271, %272, %273 : vector<8x128xi1>, vector<8x128xf32>
    %275 = arith.index_cast %c7_i32 : i32 to index
    %c0_204 = arith.constant 0 : index
    %c0_205 = arith.constant 0 : index
    %276 = vector.load %arg5[%275, %c0_204, %c0_205] : memref<8x8x128xf32, #tpu.memory_space<vmem>>, vector<1x8x128xf32>
    %277 = vector.shape_cast %276 : vector<1x8x128xf32> to vector<8x128xf32>
    %278 = vector.shape_cast %274 : vector<8x128xf32> to vector<1x8x128xf32>
    tpu.vector_store %arg5[%275, %c0_204, %c0_205], %278 {strides = array<i32>} : memref<8x8x128xf32, #tpu.memory_space<vmem>>, vector<1x8x128xf32>,
    %cst_206 = arith.constant 0.000000e+00 : f32
    %279 = vector.broadcast %cst_206 : f32 to vector<8x128xf32>
    %280 = arith.select %271, %279, %269 : vector<8x128xi1>, vector<8x128xf32>
    %c0_207 = arith.constant 0 : index
    %c0_208 = arith.constant 0 : index
    %281 = vector.load %arg7[%c0_207, %c0_208] : memref<8x128xf32, #tpu.memory_space<vmem>>, vector<8x128xf32>
    tpu.vector_store %arg7[%c0_207, %c0_208], %280 {strides = array<i32>} : memref<8x128xf32, #tpu.memory_space<vmem>>, vector<8x128xf32>,
    %c8_i32 = arith.constant 8 : i32
    return
  }
  func.func @transform_0(%arg0: i32, %arg1: i32) -> (i32, i32, i32) {
    %c0_i32 = arith.constant 0 : i32
    %c0_i32_0 = arith.constant 0 : i32
    return %arg1, %arg0, %c0_i32 : i32, i32, i32
  }
  func.func @transform_1(%arg0: i32, %arg1: i32) -> (i32, i32) {
    %c0_i32 = arith.constant 0 : i32
    %c0_i32_0 = arith.constant 0 : i32
    %c0_i32_1 = arith.constant 0 : i32
    return %c0_i32, %c0_i32_0 : i32, i32
  }
  func.func @transform_2(%arg0: i32, %arg1: i32) -> (i32, i32) {
    %c0_i32 = arith.constant 0 : i32
    %c0_i32_0 = arith.constant 0 : i32
    %c0_i32_1 = arith.constant 0 : i32
    return %c0_i32, %c0_i32_0 : i32, i32
  }
  func.func @transform_3(%arg0: i32, %arg1: i32) -> (i32, i32, i32) {
    %c0_i32 = arith.constant 0 : i32
    %c0_i32_0 = arith.constant 0 : i32
    return %arg1, %arg0, %c0_i32 : i32, i32, i32
  }
}

</mosaic_0001>

<llo_original>
// kernel: tpu_custom_call.1
$region0: #{tpu_custom_call.1}
  #allocation0 [shape = 'u32[]', space=smem, size = 0x4, offset = 0x4, fixed_abs, tag = 'smem constant byte address 0x4 - core index']
  #allocation1 [shape = 'u32[144,128]{1,0:T(1,128)}', space=vmem, size = 0x12000, scoped, tag = 'internal scratch']
  #allocation2 [shape = 'f32[8,128]{1,0:T(8,128)}', space=vmem, size = 0x1000, scoped, tag = 'scratch operand']
  #allocation3 [shape = 'f32[8,128]{1,0:T(8,128)}', space=vmem, size = 0x1000, scoped, tag = 'scratch operand']
  #allocation4 [shape = 'f32[8,8,128]{2,1,0:T(8,128)}', space=vmem, size = 0x8000, scoped, tag = 'scratch operand']
  %s0 = inlined_call_operand.hbm [shape: f32[16,8,128], index: 0, kind: input, shape index: {}]
  %s1 = inlined_call_operand.hbm [shape: bf16[128,128], index: 1, kind: input, shape index: {}]
  %s2 = inlined_call_operand.hbm [shape: bf16[128,128], index: 2, kind: input, shape index: {}]
  %s3 = inlined_call_operand.hbm [shape: f32[16,8,128], index: 3, kind: output, shape index: {}]
  %s4 = sld [smem:[#allocation0]]
  $region61: #{tpu_custom_call.1} parent=0
    _
  %s6 = ssub.s32 1, %s4
  %s7 = scalar_select 0, %s6, %s4
  $region1: #{tpu_custom_call.1} parent=0
    #allocation5 [shape = 'u8[65536]{0}', space=vmem, size = 0x10000, scoped, tag = 'input window, operand 0']
    #allocation6 [shape = 's32[2]{0}', space=sflag, size = 0x8, scoped, tag = 'scoped memory for tpu_custom_call.1']
    #allocation7 [shape = 's32[2]{0}', space=sflag, size = 0x8, scoped, tag = 'scoped memory for tpu_custom_call.1']
    #allocation8 [shape = 'u8[32768]{0}', space=vmem, size = 0x8000, scoped, tag = 'input window, operand 1, single buffered']
    #allocation9 [shape = 's32[1]{0}', space=sflag, size = 0x4, scoped, tag = 'scoped memory for tpu_custom_call.1']
    #allocation10 [shape = 'u8[32768]{0}', space=vmem, size = 0x8000, scoped, tag = 'input window, operand 2, single buffered']
    #allocation11 [shape = 'u8[65536]{0}', space=vmem, size = 0x10000, scoped, tag = 'output window, operand 0']
    %8 = vsyncpa [#allocation6], 0
    %s9 = scalar_lea.sflag [#allocation6], 1
    %10 = vsyncpa %s9, 0
    %11 = vsyncpa [#allocation9], 0
    %12 = vsyncpa [#allocation7], 0
    %s13 = scalar_lea.sflag [#allocation7], 1
    %14 = vsyncpa %s13, 0
    loop: start=0, step=1, limit=4
    $region2: #{tpu_custom_call.1} parent=1 // loop_pre_header
      _
    $region3: #{tpu_custom_call.1} parent=1 // loop_header
      %s16 = sphi 0, %s20
      %p17 = scmp.ge.s32.totalorder %s16, 4
      %s23 = sphi 0, %s35
      %s24 = sphi 0, %s31
      %s25 = sphi 0, %s23
      %s26 = sphi 0, %s24
      %s27 = sphi 0, %s25
      %s28 = sphi 0, %s26
      %s40 = sphi 0, %s42
      %s43 = sphi 0, %s40
      %s44 = sphi 0, %s43
      %s60 = sphi 0, %s44
      %s64 = sphi 0, %s64
      %s66 = sphi 0, %s64
      %s67 = sphi 0, %s66
      %s81 = sphi 0, %s67
      %s85 = sphi 0, %s85
      %s87 = sphi 0, %s85
      %s88 = sphi 0, %s87
      %s102 = sphi 0, %s88
      %s110 = sphi 0, %s112
      %s113 = sphi 0, %s110
      %s114 = sphi 0, %s113
      %s130 = sphi 0, %s114
    $region4: #{tpu_custom_call.1} parent=1 // loop_header_branch
      %19 = sbr.rel (%p17) target = $region8
    $region5: #{tpu_custom_call.1} parent=1 // loop_body
      %s21 = ssub.s32 %s16, 1
      %s22 = ssub.s32 %s16, 2
      %s29 = sadd.s32 1, %s24
      %p30 = scmp.ge.s32.totalorder %s29, 2
      %s31 = scalar_select %p30, 0, %s29
      %s32 = sadd.s32 1, %s23
      %s33 = scalar_select %p30, %s32, %s23
      %p34 = scmp.ge.s32.totalorder %s33, 1
      %s35 = scalar_select %p34, 0, %s33
      %s36 = ssub.s32 %s24, %s31
      %s37 = ssub.s32 %s23, %s35
      %s38 = sor.u32 %s36, %s37
      %p39 = scmp.eq.s32.totalorder %s38, 0
      %s41 = sadd.s32 %s40, 1
      %s42 = scalar_select %p39, %s40, %s41
      %p45 = pneg %p39
      %p46 = scmp.eq.s32.totalorder %s16, 1
      %p47 = por %p45, %p46
      %p48 = scmp.ne.s32.totalorder %s40, %s43
      %p49 = scmp.eq.s32.totalorder %s16, 0
      %p50 = por %p48, %p49
      %p51 = scmp.ne.s32.totalorder %s40, %s43
      %p52 = scmp.eq.s32.totalorder %s21, 1
      %p53 = por %p51, %p52
      %p54 = scmp.ne.s32.totalorder %s43, %s44
      %p55 = scmp.eq.s32.totalorder %s21, 0
      %p56 = por %p54, %p55
      %p57 = scmp.ne.s32.totalorder %s43, %s44
      %p58 = scmp.eq.s32.totalorder %s22, 1
      %p59 = por %p57, %p58
      %p61 = scmp.ne.s32.totalorder %s44, %s60
      %p62 = scmp.eq.s32.totalorder %s22, 0
      %p63 = por %p61, %p62
      %s65 = sadd.s32 %s64, 1
      %p68 = scmp.eq.s32.totalorder %s16, 1
      %p69 = scmp.ne.s32.totalorder %s64, %s66
      %p70 = scmp.eq.s32.totalorder %s16, 0
      %p71 = por %p69, %p70
      %p72 = scmp.ne.s32.totalorder %s64, %s66
      %p73 = scmp.eq.s32.totalorder %s21, 1
      %p74 = por %p72, %p73
      %p75 = scmp.ne.s32.totalorder %s66, %s67
      %p76 = scmp.eq.s32.totalorder %s21, 0
      %p77 = por %p75, %p76
      %p78 = scmp.ne.s32.totalorder %s66, %s67
      %p79 = scmp.eq.s32.totalorder %s22, 1
      %p80 = por %p78, %p79
      %p82 = scmp.ne.s32.totalorder %s67, %s81
      %p83 = scmp.eq.s32.totalorder %s22, 0
      %p84 = por %p82, %p83
      %s86 = sadd.s32 %s85, 1
      %p89 = scmp.eq.s32.totalorder %s16, 1
      %p90 = scmp.ne.s32.totalorder %s85, %s87
      %p91 = scmp.eq.s32.totalorder %s16, 0
      %p92 = por %p90, %p91
      %p93 = scmp.ne.s32.totalorder %s85, %s87
      %p94 = scmp.eq.s32.totalorder %s21, 1
      %p95 = por %p93, %p94
      %p96 = scmp.ne.s32.totalorder %s87, %s88
      %p97 = scmp.eq.s32.totalorder %s21, 0
      %p98 = por %p96, %p97
      %p99 = scmp.ne.s32.totalorder %s87, %s88
      %p100 = scmp.eq.s32.totalorder %s22, 1
      %p101 = por %p99, %p100
      %p103 = scmp.ne.s32.totalorder %s88, %s102
      %p104 = scmp.eq.s32.totalorder %s22, 0
      %p105 = por %p103, %p104
      %s106 = ssub.s32 %s24, %s31
      %s107 = ssub.s32 %s23, %s35
      %s108 = sor.u32 %s106, %s107
      %p109 = scmp.eq.s32.totalorder %s108, 0
      %s111 = sadd.s32 %s110, 1
      %s112 = scalar_select %p109, %s110, %s111
      %p115 = pneg %p109
      %p116 = scmp.eq.s32.totalorder %s16, 1
      %p117 = por %p115, %p116
      %p118 = scmp.ne.s32.totalorder %s110, %s113
      %p119 = scmp.eq.s32.totalorder %s16, 0
      %p120 = por %p118, %p119
      %p121 = scmp.ne.s32.totalorder %s110, %s113
      %p122 = scmp.eq.s32.totalorder %s21, 1
      %p123 = por %p121, %p122
      %p124 = scmp.ne.s32.totalorder %s113, %s114
      %p125 = scmp.eq.s32.totalorder %s21, 0
      %p126 = por %p124, %p125
      %p127 = scmp.ne.s32.totalorder %s113, %s114
      %p128 = scmp.eq.s32.totalorder %s22, 1
      %p129 = por %p127, %p128
      %p131 = scmp.ne.s32.totalorder %s114, %s130
      %p132 = scmp.eq.s32.totalorder %s22, 0
      %p133 = por %p131, %p132
      %p134 = scmp.le.s32.totalorder 1, %s16
      %p135 = scmp.lt.s32.totalorder %s16, 3
      %p136 = pnand %p134, %p135
      %p137 = pneg %p136
      // Predicated region
      $region9: #{tpu_custom_call.1} parent=5 // pred_check
        _
      $region10: #{tpu_custom_call.1} parent=5 // pred_check_branch
        %139 = sbr.rel (%p136) target = $region12
      $region11: #{tpu_custom_call.1} parent=5 // pred_region
        %s140 = ssub.s32 %s16, 1
        // Predicated region
        $region13: #{tpu_custom_call.1} parent=11 // pred_check
          %p141 = pneg %p77
        $region14: #{tpu_custom_call.1} parent=11 // pred_check_branch
          %143 = sbr.rel (%p141) target = $region16
        $region15: #{tpu_custom_call.1} parent=11 // pred_region
          %s145 = ssub.s32 1024, 1024
          %146 = vsyncadd [#allocation9], %s145
          %s147 = sshll.u32 [#allocation8], 4
          %s148 = int_to_ptr.vmem [resolvable:$true] %s147
          %153 = dma.hbm_to_vmem [thread:$0]  %s1, 1024, %s148, [#allocation9], 64, 64, 4
        $region16: #{tpu_custom_call.1} parent=11 // pred_fallthru
          _
        // Predicated region
        $region17: #{tpu_custom_call.1} parent=11 // pred_check
          %p154 = pneg %p98
        $region18: #{tpu_custom_call.1} parent=11 // pred_check_branch
          %156 = sbr.rel (%p154) target = $region20
        $region19: #{tpu_custom_call.1} parent=11 // pred_region
          %s158 = ssub.s32 1024, 1024
          %159 = vsyncadd [#allocation9], %s158
          %s160 = sshll.u32 [#allocation10], 4
          %s161 = int_to_ptr.vmem [resolvable:$true] %s160
          %166 = dma.hbm_to_vmem [thread:$0]  %s2, 1024, %s161, [#allocation9], 64, 64, 4
        $region20: #{tpu_custom_call.1} parent=11 // pred_fallthru
          _
      $region12: #{tpu_custom_call.1} parent=5 // pred_fallthru
        _
      %p167 = scmp.lt.s32.totalorder %s16, 2
      // Predicated region
      $region21: #{tpu_custom_call.1} parent=5 // pred_check
        %p168 = pneg %p167
      $region22: #{tpu_custom_call.1} parent=5 // pred_check_branch
        %170 = sbr.rel (%p168) target = $region24
      $region23: #{tpu_custom_call.1} parent=5 // pred_region
        // Predicated region
        $region25: #{tpu_custom_call.1} parent=23 // pred_check
          %p171 = pneg %p50
        $region26: #{tpu_custom_call.1} parent=23 // pred_check_branch
          %173 = sbr.rel (%p171) target = $region28
        $region27: #{tpu_custom_call.1} parent=23 // pred_region
          %s174 = sand.u32 %s40, 1
          %s175 = scalar_lea.sflag [#allocation6], %s174
          %s176 = sand.u32 %s40, 1
          %s177 = smul.addr %s176, 64
          %s178 = scalar_lea.vmem [#allocation5], %s177
          %s179 = smul.u32 8, %s24
          %s181 = ssub.s32 1024, 1024
          %182 = vsyncadd %s175, %s181
          %s183 = sadd.s32 %s23, %s179
          %s184 = smul.addr %s183, 128
          %s185 = scalar_lea.hbm %s0, %s184
          %s186 = sshll.u32 %s178, 4
          %s187 = int_to_ptr.vmem [resolvable:$true] %s186
          %192 = dma.hbm_to_vmem [thread:$0]  %s185, 1024, %s187, %s175, 128, 128, 8
        $region28: #{tpu_custom_call.1} parent=23 // pred_fallthru
          _
      $region24: #{tpu_custom_call.1} parent=5 // pred_fallthru
        _
      %p193 = scmp.le.s32.totalorder 1, %s16
      %p194 = scmp.lt.s32.totalorder %s16, 3
      %p195 = pnand %p193, %p194
      %p196 = pneg %p195
      // Predicated region
      $region29: #{tpu_custom_call.1} parent=5 // pred_check
        _
      $region30: #{tpu_custom_call.1} parent=5 // pred_check_branch
        %198 = sbr.rel (%p195) target = $region32
      $region31: #{tpu_custom_call.1} parent=5 // pred_region
        %s199 = ssub.s32 %s16, 1
        %s200 = sand.u32 %s43, 1
        %s201 = scalar_lea.sflag [#allocation6], %s200
        %s202 = sand.u32 %s43, 1
        %s203 = smul.addr %s202, 64
        %s204 = scalar_lea.vmem [#allocation5], %s203
        // Predicated region
        $region33: #{tpu_custom_call.1} parent=31 // pred_check
          %p205 = pneg %p56
        $region34: #{tpu_custom_call.1} parent=31 // pred_check_branch
          %207 = sbr.rel (%p205) target = $region36
        $region35: #{tpu_custom_call.1} parent=31 // pred_region
          %208 = dma.done %s201, 1024
        $region36: #{tpu_custom_call.1} parent=31 // pred_fallthru
          _
        // Predicated region
        $region37: #{tpu_custom_call.1} parent=31 // pred_check
          %p209 = pneg %p77
        $region38: #{tpu_custom_call.1} parent=31 // pred_check_branch
          %211 = sbr.rel (%p209) target = $region40
        $region39: #{tpu_custom_call.1} parent=31 // pred_region
          %212 = dma.done [#allocation9], 1024
        $region40: #{tpu_custom_call.1} parent=31 // pred_fallthru
          _
        // Predicated region
        $region41: #{tpu_custom_call.1} parent=31 // pred_check
          %p213 = pneg %p98
        $region42: #{tpu_custom_call.1} parent=31 // pred_check_branch
          %215 = sbr.rel (%p213) target = $region44
        $region43: #{tpu_custom_call.1} parent=31 // pred_region
          %216 = dma.done [#allocation9], 1024
        $region44: #{tpu_custom_call.1} parent=31 // pred_fallthru
          _
        %s217 = sand.u32 %s43, 1
        %s218 = scalar_lea.sflag [#allocation6], %s217
        %s219 = sand.u32 %s43, 1
        %s220 = smul.addr %s219, 64
        %s221 = scalar_lea.vmem [#allocation5], %s220
        %p222 = pneg %p56
        %p223 = pneg %p53
        %p224 = pneg %p77
        %p225 = pneg %p74
        %p226 = pneg %p98
        %p227 = pneg %p95
        %p228 = pneg %p126
        %p229 = pneg %p123
        %s230 = sand.u32 %s113, 1
        %s231 = scalar_lea.sflag [#allocation7], %s230
        %s232 = sand.u32 %s113, 1
        %s233 = smul.addr %s232, 64
        %s234 = scalar_lea.vmem [#allocation11], %s233
        %s235 = smul.u32 8, %s26
        %s236 = smul.u32 8, %s26
        %p238 = scmp.eq.s32.totalorder %s26, 0
        // Predicated region
        $region45: #{tpu_custom_call.1} parent=31 // pred_check
          %p239 = pneg %p238
        $region46: #{tpu_custom_call.1} parent=31 // pred_check_branch
          %241 = sbr.rel (%p239) target = $region48
        $region47: #{tpu_custom_call.1} parent=31 // pred_region
          %242 = vst [vmem:[#allocation2] sm:$0xff] 0.0
          %243 = vst [vmem:[#allocation3] sm:$0xff] 0.0
        $region48: #{tpu_custom_call.1} parent=31 // pred_fallthru
          _
        %v244 = vld [vmem:[%s204] sm:$0xff]
        %v245 = vld [vmem:[%s204 + $0x8] sm:$0xff]
        %v246 = vld [vmem:[%s204 + $0x10] sm:$0xff]
        %v247 = vld [vmem:[%s204 + $0x18] sm:$0xff]
        %v248 = vld [vmem:[%s204 + $0x20] sm:$0xff]
        %v249 = vld [vmem:[%s204 + $0x28] sm:$0xff]
        %v250 = vld [vmem:[%s204 + $0x30] sm:$0xff]
        %v251 = vld [vmem:[%s204 + $0x38] sm:$0xff]
        %v252 = vpack.c.bf16 %v245, %v244
        %v253 = vpack.c.bf16 %v247, %v246
        %v254 = vpack.c.bf16 %v249, %v248
        %v255 = vpack.c.bf16 %v251, %v250
        %v256 = vld [vmem:[#allocation8] sm:$0xf]
        %v257 = vld [vmem:[#allocation8 + $0x4] sm:$0xf]
        %v258 = vld [vmem:[#allocation8 + $0x8] sm:$0xf]
        %v259 = vld [vmem:[#allocation8 + $0xc] sm:$0xf]
        %v260 = vld [vmem:[#allocation8 + $0x10] sm:$0xf]
        %v261 = vld [vmem:[#allocation8 + $0x14] sm:$0xf]
        %v262 = vld [vmem:[#allocation8 + $0x18] sm:$0xf]
        %v263 = vld [vmem:[#allocation8 + $0x1c] sm:$0xf]
        %v264 = vld [vmem:[#allocation8 + $0x20] sm:$0xf]
        %v265 = vld [vmem:[#allocation8 + $0x24] sm:$0xf]
        %v266 = vld [vmem:[#allocation8 + $0x28] sm:$0xf]
        %v267 = vld [vmem:[#allocation8 + $0x2c] sm:$0xf]
        %v268 = vld [vmem:[#allocation8 + $0x30] sm:$0xf]
        %v269 = vld [vmem:[#allocation8 + $0x34] sm:$0xf]
        %v270 = vld [vmem:[#allocation8 + $0x38] sm:$0xf]
        %v271 = vld [vmem:[#allocation8 + $0x3c] sm:$0xf]
        %v288 = vunpack.c.l.b16 %v256
        %v289 = vunpack.c.l.b16 %v257
        %v290 = vunpack.c.l.b16 %v258
        %v291 = vunpack.c.l.b16 %v259
        %v292 = vunpack.c.l.b16 %v260
        %v293 = vunpack.c.l.b16 %v261
        %v294 = vunpack.c.l.b16 %v262
        %v295 = vunpack.c.l.b16 %v263
        %v296 = vunpack.c.l.b16 %v264
        %v297 = vunpack.c.l.b16 %v265
        %v298 = vunpack.c.l.b16 %v266
        %v299 = vunpack.c.l.b16 %v267
        %v300 = vunpack.c.l.b16 %v268
        %v301 = vunpack.c.l.b16 %v269
        %v302 = vunpack.c.l.b16 %v270
        %v303 = vunpack.c.l.b16 %v271
        %v304 = vpack.c.b16 %v289, %v288
        %v305 = vpack.c.b16 %v291, %v290
        %v306 = vpack.c.b16 %v293, %v292
        %v307 = vpack.c.b16 %v295, %v294
        %v308 = vpack.c.b16 %v297, %v296
        %v309 = vpack.c.b16 %v299, %v298
        %v310 = vpack.c.b16 %v301, %v300
        %v311 = vpack.c.b16 %v303, %v302
        %320 = vmatprep.subr.bf16.mxu0 0
        %321 = vmatpush1.bf16.msra.mxu0 %v304
        %322 = vmatprep.subr.bf16.mxu0 0
        %323 = vmatpush1.bf16.msra.mxu0 %v305
        %324 = vmatprep.subr.bf16.mxu0 0
        %325 = vmatpush1.bf16.msra.mxu0 %v306
        %326 = vmatprep.subr.bf16.mxu0 0
        %327 = vmatpush1.bf16.msra.mxu0 %v307
        %328 = vmatprep.subr.bf16.mxu0 0
        %329 = vmatpush1.bf16.msra.mxu0 %v308
        %330 = vmatprep.subr.bf16.mxu0 0
        %331 = vmatpush1.bf16.msra.mxu0 %v309
        %332 = vmatprep.subr.bf16.mxu0 0
        %333 = vmatpush1.bf16.msra.mxu0 %v310
        %334 = vmatprep.subr.bf16.mxu0 0
        %335 = vmatpush1.bf16.msra.mxu0 %v311
        %336 = vmatprep.subr.bf16.mxu0 0
        %337 = vmatpush1.bf16.msra.mxu0 0
        %338 = vmatprep.subr.bf16.mxu0 0
        %339 = vmatpush1.bf16.msra.mxu0 0
        %340 = vmatprep.subr.bf16.mxu0 0
        %341 = vmatpush1.bf16.msra.mxu0 0
        %342 = vmatprep.subr.bf16.mxu0 0
        %343 = vmatpush1.bf16.msra.mxu0 0
        %344 = vmatprep.subr.bf16.mxu0 0
        %345 = vmatpush1.bf16.msra.mxu0 0
        %346 = vmatprep.subr.bf16.mxu0 0
        %347 = vmatpush1.bf16.msra.mxu0 0
        %348 = vmatprep.subr.bf16.mxu0 0
        %349 = vmatpush1.bf16.msra.mxu0 0
        %350 = vmatprep.subr.bf16.mxu0 0
        %351 = vmatpush1.bf16.msra.mxu0 0
        %352 = vmatprep.mubr.bf16.mxu0 0
        %353 = vmatmul.mubr.bf16.gmra.mrb[0].mxu0 %v252
        %v354 = vpop.f32.mrb[0].mxu0
        %v355 = vadd.f32 0.0, %v354
        %v356 = vpop.f32.mrb[0].mxu0
        %v357 = vpop.f32.mrb[0].mxu0
        %v358 = vadd.f32 0.0, %v357
        %v359 = vpop.f32.mrb[0].mxu0
        %360 = vmatprep.mubr.bf16.mxu0 0
        %361 = vmatmul.mubr.bf16.gmra.mrb[0].mxu0 %v253
        %v362 = vpop.f32.mrb[0].mxu0
        %v363 = vadd.f32 0.0, %v362
        %v364 = vpop.f32.mrb[0].mxu0
        %v365 = vpop.f32.mrb[0].mxu0
        %v366 = vadd.f32 0.0, %v365
        %v367 = vpop.f32.mrb[0].mxu0
        %368 = vmatprep.mubr.bf16.mxu0 0
        %369 = vmatmul.mubr.bf16.gmra.mrb[0].mxu0 %v254
        %v370 = vpop.f32.mrb[0].mxu0
        %v371 = vadd.f32 0.0, %v370
        %v372 = vpop.f32.mrb[0].mxu0
        %v373 = vpop.f32.mrb[0].mxu0
        %v374 = vadd.f32 0.0, %v373
        %v375 = vpop.f32.mrb[0].mxu0
        %376 = vmatprep.mubr.bf16.mxu0 0
        %377 = vmatmul.mubr.bf16.gmra.mrb[0].mxu0 %v255
        %v378 = vpop.f32.mrb[0].mxu0
        %v379 = vadd.f32 0.0, %v378
        %v380 = vpop.f32.mrb[0].mxu0
        %v381 = vpop.f32.mrb[0].mxu0
        %v382 = vadd.f32 0.0, %v381
        %v383 = vpop.f32.mrb[0].mxu0
        %384 = vdwg.mxu0
        %385 = vst [vmem:[#allocation4] sm:$0xff] %v355
        %386 = vst [vmem:[#allocation4 + $0x8] sm:$0xff] %v358
        %387 = vst [vmem:[#allocation4 + $0x10] sm:$0xff] %v363
        %388 = vst [vmem:[#allocation4 + $0x18] sm:$0xff] %v366
        %389 = vst [vmem:[#allocation4 + $0x20] sm:$0xff] %v371
        %390 = vst [vmem:[#allocation4 + $0x28] sm:$0xff] %v374
        %391 = vst [vmem:[#allocation4 + $0x30] sm:$0xff] %v379
        %392 = vst [vmem:[#allocation4 + $0x38] sm:$0xff] %v382
        %v393 = vld [vmem:[#allocation2] sm:$0xff]
        %v394 = vmul.f32 %v393, 0.9
        %v395 = vld [vmem:[#allocation4] sm:$0xff]
        %v396 = vadd.f32 %v394, %v395
        %vm397 = vcmp.ge.f32.partialorder %v396, 1.0
        %v398 = vsel %vm397, 1.0, 0.0
        %v399 = vsel %vm397, 0.0, %v396
        %400 = vst [vmem:[#allocation2] sm:$0xff] %v399
        %v401 = vpack.c.bf16 %v398, %v398
        %v402 = vld [vmem:[#allocation10] sm:$0xf]
        %v403 = vld [vmem:[#allocation10 + $0x4] sm:$0xf]
        %v404 = vld [vmem:[#allocation10 + $0x8] sm:$0xf]
        %v405 = vld [vmem:[#allocation10 + $0xc] sm:$0xf]
        %v406 = vld [vmem:[#allocation10 + $0x10] sm:$0xf]
        %v407 = vld [vmem:[#allocation10 + $0x14] sm:$0xf]
        %v408 = vld [vmem:[#allocation10 + $0x18] sm:$0xf]
        %v409 = vld [vmem:[#allocation10 + $0x1c] sm:$0xf]
        %v410 = vld [vmem:[#allocation10 + $0x20] sm:$0xf]
        %v411 = vld [vmem:[#allocation10 + $0x24] sm:$0xf]
        %v412 = vld [vmem:[#allocation10 + $0x28] sm:$0xf]
        %v413 = vld [vmem:[#allocation10 + $0x2c] sm:$0xf]
        %v414 = vld [vmem:[#allocation10 + $0x30] sm:$0xf]
        %v415 = vld [vmem:[#allocation10 + $0x34] sm:$0xf]
        %v416 = vld [vmem:[#allocation10 + $0x38] sm:$0xf]
        %v417 = vld [vmem:[#allocation10 + $0x3c] sm:$0xf]
        %v434 = vunpack.c.l.b16 %v402
        %v435 = vunpack.c.l.b16 %v403
        %v436 = vunpack.c.l.b16 %v404
        %v437 = vunpack.c.l.b16 %v405
        %v438 = vunpack.c.l.b16 %v406
        %v439 = vunpack.c.l.b16 %v407
        %v440 = vunpack.c.l.b16 %v408
        %v441 = vunpack.c.l.b16 %v409
        %v442 = vunpack.c.l.b16 %v410
        %v443 = vunpack.c.l.b16 %v411
        %v444 = vunpack.c.l.b16 %v412
        %v445 = vunpack.c.l.b16 %v413
        %v446 = vunpack.c.l.b16 %v414
        %v447 = vunpack.c.l.b16 %v415
        %v448 = vunpack.c.l.b16 %v416
        %v449 = vunpack.c.l.b16 %v417
        %v450 = vpack.c.b16 %v435, %v434
        %v451 = vpack.c.b16 %v437, %v436
        %v452 = vpack.c.b16 %v439, %v438
        %v453 = vpack.c.b16 %v441, %v440
        %v454 = vpack.c.b16 %v443, %v442
        %v455 = vpack.c.b16 %v445, %v444
        %v456 = vpack.c.b16 %v447, %v446
        %v457 = vpack.c.b16 %v449, %v448
        %466 = vmatprep.subr.bf16.mxu0 0
        %467 = vmatpush1.bf16.msra.mxu0 %v450
        %468 = vmatprep.subr.bf16.mxu0 0
        %469 = vmatpush1.bf16.msra.mxu0 %v451
        %470 = vmatprep.subr.bf16.mxu0 0
        %471 = vmatpush1.bf16.msra.mxu0 %v452
        %472 = vmatprep.subr.bf16.mxu0 0
        %473 = vmatpush1.bf16.msra.mxu0 %v453
        %474 = vmatprep.subr.bf16.mxu0 0
        %475 = vmatpush1.bf16.msra.mxu0 %v454
        %476 = vmatprep.subr.bf16.mxu0 0
        %477 = vmatpush1.bf16.msra.mxu0 %v455
        %478 = vmatprep.subr.bf16.mxu0 0
        %479 = vmatpush1.bf16.msra.mxu0 %v456
        %480 = vmatprep.subr.bf16.mxu0 0
        %481 = vmatpush1.bf16.msra.mxu0 %v457
        %482 = vmatprep.subr.bf16.mxu0 0
        %483 = vmatpush1.bf16.msra.mxu0 0
        %484 = vmatprep.subr.bf16.mxu0 0
        %485 = vmatpush1.bf16.msra.mxu0 0
        %486 = vmatprep.subr.bf16.mxu0 0
        %487 = vmatpush1.bf16.msra.mxu0 0
        %488 = vmatprep.subr.bf16.mxu0 0
        %489 = vmatpush1.bf16.msra.mxu0 0
        %490 = vmatprep.subr.bf16.mxu0 0
        %491 = vmatpush1.bf16.msra.mxu0 0
        %492 = vmatprep.subr.bf16.mxu0 0
        %493 = vmatpush1.bf16.msra.mxu0 0
        %494 = vmatprep.subr.bf16.mxu0 0
        %495 = vmatpush1.bf16.msra.mxu0 0
        %496 = vmatprep.subr.bf16.mxu0 0
        %497 = vmatpush1.bf16.msra.mxu0 0
        %498 = vmatprep.mubr.bf16.mxu0 0
        %499 = vmatmul.mubr.bf16.gmra.mrb[0].mxu0 %v401
        %v500 = vpop.f32.mrb[0].mxu0
        %v501 = vadd.f32 0.0, %v500
        %v502 = vpop.f32.mrb[0].mxu0
        %v503 = vpop.f32.mrb[0].mxu0
        %v504 = vpop.f32.mrb[0].mxu0
        %505 = vdwg.mxu0
        %v506 = vld [vmem:[#allocation3] sm:$0xff]
        %v507 = vmul.f32 %v506, 0.9
        %v508 = vadd.f32 %v507, %v501
        %vm509 = vcmp.ge.f32.partialorder %v508, 1.0
        %v510 = vsel %vm509, 1.0, 0.0
        %511 = vst [vmem:[%s234] sm:$0xff] %v510
        %v512 = vsel %vm509, 0.0, %v508
        %513 = vst [vmem:[#allocation3] sm:$0xff] %v512
        %v514 = vld [vmem:[#allocation2] sm:$0xff]
        %v515 = vmul.f32 %v514, 0.9
        %s516 = scalar_lea.vmem [#allocation4], 8
        %v517 = vld [vmem:[%s516] sm:$0xff]
        %v518 = vadd.f32 %v515, %v517
        %vm519 = vcmp.ge.f32.partialorder %v518, 1.0
        %v520 = vsel %vm519, 1.0, 0.0
        %v521 = vsel %vm519, 0.0, %v518
        %522 = vst [vmem:[#allocation2] sm:$0xff] %v521
        %v523 = vpack.c.bf16 %v520, %v520
        %v524 = vld [vmem:[#allocation10] sm:$0xf]
        %v525 = vld [vmem:[#allocation10 + $0x4] sm:$0xf]
        %v526 = vld [vmem:[#allocation10 + $0x8] sm:$0xf]
        %v527 = vld [vmem:[#allocation10 + $0xc] sm:$0xf]
        %v528 = vld [vmem:[#allocation10 + $0x10] sm:$0xf]
        %v529 = vld [vmem:[#allocation10 + $0x14] sm:$0xf]
        %v530 = vld [vmem:[#allocation10 + $0x18] sm:$0xf]
        %v531 = vld [vmem:[#allocation10 + $0x1c] sm:$0xf]
        %v532 = vld [vmem:[#allocation10 + $0x20] sm:$0xf]
        %v533 = vld [vmem:[#allocation10 + $0x24] sm:$0xf]
        %v534 = vld [vmem:[#allocation10 + $0x28] sm:$0xf]
        %v535 = vld [vmem:[#allocation10 + $0x2c] sm:$0xf]
        %v536 = vld [vmem:[#allocation10 + $0x30] sm:$0xf]
        %v537 = vld [vmem:[#allocation10 + $0x34] sm:$0xf]
        %v538 = vld [vmem:[#allocation10 + $0x38] sm:$0xf]
        %v539 = vld [vmem:[#allocation10 + $0x3c] sm:$0xf]
        %v556 = vunpack.c.l.b16 %v524
        %v557 = vunpack.c.l.b16 %v525
        %v558 = vunpack.c.l.b16 %v526
        %v559 = vunpack.c.l.b16 %v527
        %v560 = vunpack.c.l.b16 %v528
        %v561 = vunpack.c.l.b16 %v529
        %v562 = vunpack.c.l.b16 %v530
        %v563 = vunpack.c.l.b16 %v531
        %v564 = vunpack.c.l.b16 %v532
        %v565 = vunpack.c.l.b16 %v533
        %v566 = vunpack.c.l.b16 %v534
        %v567 = vunpack.c.l.b16 %v535
        %v568 = vunpack.c.l.b16 %v536
        %v569 = vunpack.c.l.b16 %v537
        %v570 = vunpack.c.l.b16 %v538
        %v571 = vunpack.c.l.b16 %v539
        %v572 = vpack.c.b16 %v557, %v556
        %v573 = vpack.c.b16 %v559, %v558
        %v574 = vpack.c.b16 %v561, %v560
        %v575 = vpack.c.b16 %v563, %v562
        %v576 = vpack.c.b16 %v565, %v564
        %v577 = vpack.c.b16 %v567, %v566
        %v578 = vpack.c.b16 %v569, %v568
        %v579 = vpack.c.b16 %v571, %v570
        %588 = vmatprep.subr.bf16.mxu0 0
        %589 = vmatpush1.bf16.msra.mxu0 %v572
        %590 = vmatprep.subr.bf16.mxu0 0
        %591 = vmatpush1.bf16.msra.mxu0 %v573
        %592 = vmatprep.subr.bf16.mxu0 0
        %593 = vmatpush1.bf16.msra.mxu0 %v574
        %594 = vmatprep.subr.bf16.mxu0 0
        %595 = vmatpush1.bf16.msra.mxu0 %v575
        %596 = vmatprep.subr.bf16.mxu0 0
        %597 = vmatpush1.bf16.msra.mxu0 %v576
        %598 = vmatprep.subr.bf16.mxu0 0
        %599 = vmatpush1.bf16.msra.mxu0 %v577
        %600 = vmatprep.subr.bf16.mxu0 0
        %601 = vmatpush1.bf16.msra.mxu0 %v578
        %602 = vmatprep.subr.bf16.mxu0 0
        %603 = vmatpush1.bf16.msra.mxu0 %v579
        %604 = vmatprep.subr.bf16.mxu0 0
        %605 = vmatpush1.bf16.msra.mxu0 0
        %606 = vmatprep.subr.bf16.mxu0 0
        %607 = vmatpush1.bf16.msra.mxu0 0
        %608 = vmatprep.subr.bf16.mxu0 0
        %609 = vmatpush1.bf16.msra.mxu0 0
        %610 = vmatprep.subr.bf16.mxu0 0
        %611 = vmatpush1.bf16.msra.mxu0 0
        %612 = vmatprep.subr.bf16.mxu0 0
        %613 = vmatpush1.bf16.msra.mxu0 0
        %614 = vmatprep.subr.bf16.mxu0 0
        %615 = vmatpush1.bf16.msra.mxu0 0
        %616 = vmatprep.subr.bf16.mxu0 0
        %617 = vmatpush1.bf16.msra.mxu0 0
        %618 = vmatprep.subr.bf16.mxu0 0
        %619 = vmatpush1.bf16.msra.mxu0 0
        %620 = vmatprep.mubr.bf16.mxu0 0
        %621 = vmatmul.mubr.bf16.gmra.mrb[0].mxu0 %v523
        %v622 = vpop.f32.mrb[0].mxu0
        %v623 = vadd.f32 0.0, %v622
        %v624 = vpop.f32.mrb[0].mxu0
        %v625 = vpop.f32.mrb[0].mxu0
        %v626 = vpop.f32.mrb[0].mxu0
        %627 = vdwg.mxu0
        %v628 = vld [vmem:[#allocation3] sm:$0xff]
        %v629 = vmul.f32 %v628, 0.9
        %v630 = vadd.f32 %v629, %v623
        %vm631 = vcmp.ge.f32.partialorder %v630, 1.0
        %v632 = vsel %vm631, 1.0, 0.0
        %s633 = scalar_lea.vmem %s234, 8 [#allocation11]
        %634 = vst [vmem:[%s633] sm:$0xff] %v632
        %v635 = vsel %vm631, 0.0, %v630
        %636 = vst [vmem:[#allocation3] sm:$0xff] %v635
        %v637 = vld [vmem:[#allocation2] sm:$0xff]
        %v638 = vmul.f32 %v637, 0.9
        %s639 = scalar_lea.vmem [#allocation4], 16
        %v640 = vld [vmem:[%s639] sm:$0xff]
        %v641 = vadd.f32 %v638, %v640
        %vm642 = vcmp.ge.f32.partialorder %v641, 1.0
        %v643 = vsel %vm642, 1.0, 0.0
        %v644 = vsel %vm642, 0.0, %v641
        %645 = vst [vmem:[#allocation2] sm:$0xff] %v644
        %v646 = vpack.c.bf16 %v643, %v643
        %v647 = vld [vmem:[#allocation10] sm:$0xf]
        %v648 = vld [vmem:[#allocation10 + $0x4] sm:$0xf]
        %v649 = vld [vmem:[#allocation10 + $0x8] sm:$0xf]
        %v650 = vld [vmem:[#allocation10 + $0xc] sm:$0xf]
        %v651 = vld [vmem:[#allocation10 + $0x10] sm:$0xf]
        %v652 = vld [vmem:[#allocation10 + $0x14] sm:$0xf]
        %v653 = vld [vmem:[#allocation10 + $0x18] sm:$0xf]
        %v654 = vld [vmem:[#allocation10 + $0x1c] sm:$0xf]
        %v655 = vld [vmem:[#allocation10 + $0x20] sm:$0xf]
        %v656 = vld [vmem:[#allocation10 + $0x24] sm:$0xf]
        %v657 = vld [vmem:[#allocation10 + $0x28] sm:$0xf]
        %v658 = vld [vmem:[#allocation10 + $0x2c] sm:$0xf]
        %v659 = vld [vmem:[#allocation10 + $0x30] sm:$0xf]
        %v660 = vld [vmem:[#allocation10 + $0x34] sm:$0xf]
        %v661 = vld [vmem:[#allocation10 + $0x38] sm:$0xf]
        %v662 = vld [vmem:[#allocation10 + $0x3c] sm:$0xf]
        %v679 = vunpack.c.l.b16 %v647
        %v680 = vunpack.c.l.b16 %v648
        %v681 = vunpack.c.l.b16 %v649
        %v682 = vunpack.c.l.b16 %v650
        %v683 = vunpack.c.l.b16 %v651
        %v684 = vunpack.c.l.b16 %v652
        %v685 = vunpack.c.l.b16 %v653
        %v686 = vunpack.c.l.b16 %v654
        %v687 = vunpack.c.l.b16 %v655
        %v688 = vunpack.c.l.b16 %v656
        %v689 = vunpack.c.l.b16 %v657
        %v690 = vunpack.c.l.b16 %v658
        %v691 = vunpack.c.l.b16 %v659
        %v692 = vunpack.c.l.b16 %v660
        %v693 = vunpack.c.l.b16 %v661
        %v694 = vunpack.c.l.b16 %v662
        %v695 = vpack.c.b16 %v680, %v679
        %v696 = vpack.c.b16 %v682, %v681
        %v697 = vpack.c.b16 %v684, %v683
        %v698 = vpack.c.b16 %v686, %v685
        %v699 = vpack.c.b16 %v688, %v687
        %v700 = vpack.c.b16 %v690, %v689
        %v701 = vpack.c.b16 %v692, %v691
        %v702 = vpack.c.b16 %v694, %v693
        %711 = vmatprep.subr.bf16.mxu0 0
        %712 = vmatpush1.bf16.msra.mxu0 %v695
        %713 = vmatprep.subr.bf16.mxu0 0
        %714 = vmatpush1.bf16.msra.mxu0 %v696
        %715 = vmatprep.subr.bf16.mxu0 0
        %716 = vmatpush1.bf16.msra.mxu0 %v697
        %717 = vmatprep.subr.bf16.mxu0 0
        %718 = vmatpush1.bf16.msra.mxu0 %v698
        %719 = vmatprep.subr.bf16.mxu0 0
        %720 = vmatpush1.bf16.msra.mxu0 %v699
        %721 = vmatprep.subr.bf16.mxu0 0
        %722 = vmatpush1.bf16.msra.mxu0 %v700
        %723 = vmatprep.subr.bf16.mxu0 0
        %724 = vmatpush1.bf16.msra.mxu0 %v701
        %725 = vmatprep.subr.bf16.mxu0 0
        %726 = vmatpush1.bf16.msra.mxu0 %v702
        %727 = vmatprep.subr.bf16.mxu0 0
        %728 = vmatpush1.bf16.msra.mxu0 0
        %729 = vmatprep.subr.bf16.mxu0 0
        %730 = vmatpush1.bf16.msra.mxu0 0
        %731 = vmatprep.subr.bf16.mxu0 0
        %732 = vmatpush1.bf16.msra.mxu0 0
        %733 = vmatprep.subr.bf16.mxu0 0
        %734 = vmatpush1.bf16.msra.mxu0 0
        %735 = vmatprep.subr.bf16.mxu0 0
        %736 = vmatpush1.bf16.msra.mxu0 0
        %737 = vmatprep.subr.bf16.mxu0 0
        %738 = vmatpush1.bf16.msra.mxu0 0
        %739 = vmatprep.subr.bf16.mxu0 0
        %740 = vmatpush1.bf16.msra.mxu0 0
        %741 = vmatprep.subr.bf16.mxu0 0
        %742 = vmatpush1.bf16.msra.mxu0 0
        %743 = vmatprep.mubr.bf16.mxu0 0
        %744 = vmatmul.mubr.bf16.gmra.mrb[0].mxu0 %v646
        %v745 = vpop.f32.mrb[0].mxu0
        %v746 = vadd.f32 0.0, %v745
        %v747 = vpop.f32.mrb[0].mxu0
        %v748 = vpop.f32.mrb[0].mxu0
        %v749 = vpop.f32.mrb[0].mxu0
        %750 = vdwg.mxu0
        %v751 = vld [vmem:[#allocation3] sm:$0xff]
        %v752 = vmul.f32 %v751, 0.9
        %v753 = vadd.f32 %v752, %v746
        %vm754 = vcmp.ge.f32.partialorder %v753, 1.0
        %v755 = vsel %vm754, 1.0, 0.0
        %s756 = scalar_lea.vmem %s234, 16 [#allocation11]
        %757 = vst [vmem:[%s756] sm:$0xff] %v755
        %v758 = vsel %vm754, 0.0, %v753
        %759 = vst [vmem:[#allocation3] sm:$0xff] %v758
        %v760 = vld [vmem:[#allocation2] sm:$0xff]
        %v761 = vmul.f32 %v760, 0.9
        %s762 = scalar_lea.vmem [#allocation4], 24
        %v763 = vld [vmem:[%s762] sm:$0xff]
        %v764 = vadd.f32 %v761, %v763
        %vm765 = vcmp.ge.f32.partialorder %v764, 1.0
        %v766 = vsel %vm765, 1.0, 0.0
        %v767 = vsel %vm765, 0.0, %v764
        %768 = vst [vmem:[#allocation2] sm:$0xff] %v767
        %v769 = vpack.c.bf16 %v766, %v766
        %v770 = vld [vmem:[#allocation10] sm:$0xf]
        %v771 = vld [vmem:[#allocation10 + $0x4] sm:$0xf]
        %v772 = vld [vmem:[#allocation10 + $0x8] sm:$0xf]
        %v773 = vld [vmem:[#allocation10 + $0xc] sm:$0xf]
        %v774 = vld [vmem:[#allocation10 + $0x10] sm:$0xf]
        %v775 = vld [vmem:[#allocation10 + $0x14] sm:$0xf]
        %v776 = vld [vmem:[#allocation10 + $0x18] sm:$0xf]
        %v777 = vld [vmem:[#allocation10 + $0x1c] sm:$0xf]
        %v778 = vld [vmem:[#allocation10 + $0x20] sm:$0xf]
        %v779 = vld [vmem:[#allocation10 + $0x24] sm:$0xf]
        %v780 = vld [vmem:[#allocation10 + $0x28] sm:$0xf]
        %v781 = vld [vmem:[#allocation10 + $0x2c] sm:$0xf]
        %v782 = vld [vmem:[#allocation10 + $0x30] sm:$0xf]
        %v783 = vld [vmem:[#allocation10 + $0x34] sm:$0xf]
        %v784 = vld [vmem:[#allocation10 + $0x38] sm:$0xf]
        %v785 = vld [vmem:[#allocation10 + $0x3c] sm:$0xf]
        %v802 = vunpack.c.l.b16 %v770
        %v803 = vunpack.c.l.b16 %v771
        %v804 = vunpack.c.l.b16 %v772
        %v805 = vunpack.c.l.b16 %v773
        %v806 = vunpack.c.l.b16 %v774
        %v807 = vunpack.c.l.b16 %v775
        %v808 = vunpack.c.l.b16 %v776
        %v809 = vunpack.c.l.b16 %v777
        %v810 = vunpack.c.l.b16 %v778
        %v811 = vunpack.c.l.b16 %v779
        %v812 = vunpack.c.l.b16 %v780
        %v813 = vunpack.c.l.b16 %v781
        %v814 = vunpack.c.l.b16 %v782
        %v815 = vunpack.c.l.b16 %v783
        %v816 = vunpack.c.l.b16 %v784
        %v817 = vunpack.c.l.b16 %v785
        %v818 = vpack.c.b16 %v803, %v802
        %v819 = vpack.c.b16 %v805, %v804
        %v820 = vpack.c.b16 %v807, %v806
        %v821 = vpack.c.b16 %v809, %v808
        %v822 = vpack.c.b16 %v811, %v810
        %v823 = vpack.c.b16 %v813, %v812
        %v824 = vpack.c.b16 %v815, %v814
        %v825 = vpack.c.b16 %v817, %v816
        %834 = vmatprep.subr.bf16.mxu0 0
        %835 = vmatpush1.bf16.msra.mxu0 %v818
        %836 = vmatprep.subr.bf16.mxu0 0
        %837 = vmatpush1.bf16.msra.mxu0 %v819
        %838 = vmatprep.subr.bf16.mxu0 0
        %839 = vmatpush1.bf16.msra.mxu0 %v820
        %840 = vmatprep.subr.bf16.mxu0 0
        %841 = vmatpush1.bf16.msra.mxu0 %v821
        %842 = vmatprep.subr.bf16.mxu0 0
        %843 = vmatpush1.bf16.msra.mxu0 %v822
        %844 = vmatprep.subr.bf16.mxu0 0
        %845 = vmatpush1.bf16.msra.mxu0 %v823
        %846 = vmatprep.subr.bf16.mxu0 0
        %847 = vmatpush1.bf16.msra.mxu0 %v824
        %848 = vmatprep.subr.bf16.mxu0 0
        %849 = vmatpush1.bf16.msra.mxu0 %v825
        %850 = vmatprep.subr.bf16.mxu0 0
        %851 = vmatpush1.bf16.msra.mxu0 0
        %852 = vmatprep.subr.bf16.mxu0 0
        %853 = vmatpush1.bf16.msra.mxu0 0
        %854 = vmatprep.subr.bf16.mxu0 0
        %855 = vmatpush1.bf16.msra.mxu0 0
        %856 = vmatprep.subr.bf16.mxu0 0
        %857 = vmatpush1.bf16.msra.mxu0 0
        %858 = vmatprep.subr.bf16.mxu0 0
        %859 = vmatpush1.bf16.msra.mxu0 0
        %860 = vmatprep.subr.bf16.mxu0 0
        %861 = vmatpush1.bf16.msra.mxu0 0
        %862 = vmatprep.subr.bf16.mxu0 0
        %863 = vmatpush1.bf16.msra.mxu0 0
        %864 = vmatprep.subr.bf16.mxu0 0
        %865 = vmatpush1.bf16.msra.mxu0 0
        %866 = vmatprep.mubr.bf16.mxu0 0
        %867 = vmatmul.mubr.bf16.gmra.mrb[0].mxu0 %v769
        %v868 = vpop.f32.mrb[0].mxu0
        %v869 = vadd.f32 0.0, %v868
        %v870 = vpop.f32.mrb[0].mxu0
        %v871 = vpop.f32.mrb[0].mxu0
        %v872 = vpop.f32.mrb[0].mxu0
        %873 = vdwg.mxu0
        %v874 = vld [vmem:[#allocation3] sm:$0xff]
        %v875 = vmul.f32 %v874, 0.9
        %v876 = vadd.f32 %v875, %v869
        %vm877 = vcmp.ge.f32.partialorder %v876, 1.0
        %v878 = vsel %vm877, 1.0, 0.0
        %s879 = scalar_lea.vmem %s234, 24 [#allocation11]
        %880 = vst [vmem:[%s879] sm:$0xff] %v878
        %v881 = vsel %vm877, 0.0, %v876
        %882 = vst [vmem:[#allocation3] sm:$0xff] %v881
        %v883 = vld [vmem:[#allocation2] sm:$0xff]
        %v884 = vmul.f32 %v883, 0.9
        %s885 = scalar_lea.vmem [#allocation4], 32
        %v886 = vld [vmem:[%s885] sm:$0xff]
        %v887 = vadd.f32 %v884, %v886
        %vm888 = vcmp.ge.f32.partialorder %v887, 1.0
        %v889 = vsel %vm888, 1.0, 0.0
        %v890 = vsel %vm888, 0.0, %v887
        %891 = vst [vmem:[#allocation2] sm:$0xff] %v890
        %v892 = vpack.c.bf16 %v889, %v889
        %v893 = vld [vmem:[#allocation10] sm:$0xf]
        %v894 = vld [vmem:[#allocation10 + $0x4] sm:$0xf]
        %v895 = vld [vmem:[#allocation10 + $0x8] sm:$0xf]
        %v896 = vld [vmem:[#allocation10 + $0xc] sm:$0xf]
        %v897 = vld [vmem:[#allocation10 + $0x10] sm:$0xf]
        %v898 = vld [vmem:[#allocation10 + $0x14] sm:$0xf]
        %v899 = vld [vmem:[#allocation10 + $0x18] sm:$0xf]
        %v900 = vld [vmem:[#allocation10 + $0x1c] sm:$0xf]
        %v901 = vld [vmem:[#allocation10 + $0x20] sm:$0xf]
        %v902 = vld [vmem:[#allocation10 + $0x24] sm:$0xf]
        %v903 = vld [vmem:[#allocation10 + $0x28] sm:$0xf]
        %v904 = vld [vmem:[#allocation10 + $0x2c] sm:$0xf]
        %v905 = vld [vmem:[#allocation10 + $0x30] sm:$0xf]
        %v906 = vld [vmem:[#allocation10 + $0x34] sm:$0xf]
        %v907 = vld [vmem:[#allocation10 + $0x38] sm:$0xf]
        %v908 = vld [vmem:[#allocation10 + $0x3c] sm:$0xf]
        %v925 = vunpack.c.l.b16 %v893
        %v926 = vunpack.c.l.b16 %v894
        %v927 = vunpack.c.l.b16 %v895
        %v928 = vunpack.c.l.b16 %v896
        %v929 = vunpack.c.l.b16 %v897
        %v930 = vunpack.c.l.b16 %v898
        %v931 = vunpack.c.l.b16 %v899
        %v932 = vunpack.c.l.b16 %v900
        %v933 = vunpack.c.l.b16 %v901
        %v934 = vunpack.c.l.b16 %v902
        %v935 = vunpack.c.l.b16 %v903
        %v936 = vunpack.c.l.b16 %v904
        %v937 = vunpack.c.l.b16 %v905
        %v938 = vunpack.c.l.b16 %v906
        %v939 = vunpack.c.l.b16 %v907
        %v940 = vunpack.c.l.b16 %v908
        %v941 = vpack.c.b16 %v926, %v925
        %v942 = vpack.c.b16 %v928, %v927
        %v943 = vpack.c.b16 %v930, %v929
        %v944 = vpack.c.b16 %v932, %v931
        %v945 = vpack.c.b16 %v934, %v933
        %v946 = vpack.c.b16 %v936, %v935
        %v947 = vpack.c.b16 %v938, %v937
        %v948 = vpack.c.b16 %v940, %v939
        %957 = vmatprep.subr.bf16.mxu0 0
        %958 = vmatpush1.bf16.msra.mxu0 %v941
        %959 = vmatprep.subr.bf16.mxu0 0
        %960 = vmatpush1.bf16.msra.mxu0 %v942
        %961 = vmatprep.subr.bf16.mxu0 0
        %962 = vmatpush1.bf16.msra.mxu0 %v943
        %963 = vmatprep.subr.bf16.mxu0 0
        %964 = vmatpush1.bf16.msra.mxu0 %v944
        %965 = vmatprep.subr.bf16.mxu0 0
        %966 = vmatpush1.bf16.msra.mxu0 %v945
        %967 = vmatprep.subr.bf16.mxu0 0
        %968 = vmatpush1.bf16.msra.mxu0 %v946
        %969 = vmatprep.subr.bf16.mxu0 0
        %970 = vmatpush1.bf16.msra.mxu0 %v947
        %971 = vmatprep.subr.bf16.mxu0 0
        %972 = vmatpush1.bf16.msra.mxu0 %v948
        %973 = vmatprep.subr.bf16.mxu0 0
        %974 = vmatpush1.bf16.msra.mxu0 0
        %975 = vmatprep.subr.bf16.mxu0 0
        %976 = vmatpush1.bf16.msra.mxu0 0
        %977 = vmatprep.subr.bf16.mxu0 0
        %978 = vmatpush1.bf16.msra.mxu0 0
        %979 = vmatprep.subr.bf16.mxu0 0
        %980 = vmatpush1.bf16.msra.mxu0 0
        %981 = vmatprep.subr.bf16.mxu0 0
        %982 = vmatpush1.bf16.msra.mxu0 0
        %983 = vmatprep.subr.bf16.mxu0 0
        %984 = vmatpush1.bf16.msra.mxu0 0
        %985 = vmatprep.subr.bf16.mxu0 0
        %986 = vmatpush1.bf16.msra.mxu0 0
        %987 = vmatprep.subr.bf16.mxu0 0
        %988 = vmatpush1.bf16.msra.mxu0 0
        %989 = vmatprep.mubr.bf16.mxu0 0
        %990 = vmatmul.mubr.bf16.gmra.mrb[0].mxu0 %v892
        %v991 = vpop.f32.mrb[0].mxu0
        %v992 = vadd.f32 0.0, %v991
        %v993 = vpop.f32.mrb[0].mxu0
        %v994 = vpop.f32.mrb[0].mxu0
        %v995 = vpop.f32.mrb[0].mxu0
        %996 = vdwg.mxu0
        %v997 = vld [vmem:[#allocation3] sm:$0xff]
        %v998 = vmul.f32 %v997, 0.9
        %v999 = vadd.f32 %v998, %v992
        %vm1000 = vcmp.ge.f32.partialorder %v999, 1.0
        %v1001 = vsel %vm1000, 1.0, 0.0
        %s1002 = scalar_lea.vmem %s234, 32 [#allocation11]
        %1003 = vst [vmem:[%s1002] sm:$0xff] %v1001
        %v1004 = vsel %vm1000, 0.0, %v999
        %1005 = vst [vmem:[#allocation3] sm:$0xff] %v1004
        %v1006 = vld [vmem:[#allocation2] sm:$0xff]
        %v1007 = vmul.f32 %v1006, 0.9
        %s1008 = scalar_lea.vmem [#allocation4], 40
        %v1009 = vld [vmem:[%s1008] sm:$0xff]
        %v1010 = vadd.f32 %v1007, %v1009
        %vm1011 = vcmp.ge.f32.partialorder %v1010, 1.0
        %v1012 = vsel %vm1011, 1.0, 0.0
        %v1013 = vsel %vm1011, 0.0, %v1010
        %1014 = vst [vmem:[#allocation2] sm:$0xff] %v1013
        %v1015 = vpack.c.bf16 %v1012, %v1012
        %v1016 = vld [vmem:[#allocation10] sm:$0xf]
        %v1017 = vld [vmem:[#allocation10 + $0x4] sm:$0xf]
        %v1018 = vld [vmem:[#allocation10 + $0x8] sm:$0xf]
        %v1019 = vld [vmem:[#allocation10 + $0xc] sm:$0xf]
        %v1020 = vld [vmem:[#allocation10 + $0x10] sm:$0xf]
        %v1021 = vld [vmem:[#allocation10 + $0x14] sm:$0xf]
        %v1022 = vld [vmem:[#allocation10 + $0x18] sm:$0xf]
        %v1023 = vld [vmem:[#allocation10 + $0x1c] sm:$0xf]
        %v1024 = vld [vmem:[#allocation10 + $0x20] sm:$0xf]
        %v1025 = vld [vmem:[#allocation10 + $0x24] sm:$0xf]
        %v1026 = vld [vmem:[#allocation10 + $0x28] sm:$0xf]
        %v1027 = vld [vmem:[#allocation10 + $0x2c] sm:$0xf]
        %v1028 = vld [vmem:[#allocation10 + $0x30] sm:$0xf]
        %v1029 = vld [vmem:[#allocation10 + $0x34] sm:$0xf]
        %v1030 = vld [vmem:[#allocation10 + $0x38] sm:$0xf]
        %v1031 = vld [vmem:[#allocation10 + $0x3c] sm:$0xf]
        %v1048 = vunpack.c.l.b16 %v1016
        %v1049 = vunpack.c.l.b16 %v1017
        %v1050 = vunpack.c.l.b16 %v1018
        %v1051 = vunpack.c.l.b16 %v1019
        %v1052 = vunpack.c.l.b16 %v1020
        %v1053 = vunpack.c.l.b16 %v1021
        %v1054 = vunpack.c.l.b16 %v1022
        %v1055 = vunpack.c.l.b16 %v1023
        %v1056 = vunpack.c.l.b16 %v1024
        %v1057 = vunpack.c.l.b16 %v1025
        %v1058 = vunpack.c.l.b16 %v1026
        %v1059 = vunpack.c.l.b16 %v1027
        %v1060 = vunpack.c.l.b16 %v1028
        %v1061 = vunpack.c.l.b16 %v1029
        %v1062 = vunpack.c.l.b16 %v1030
        %v1063 = vunpack.c.l.b16 %v1031
        %v1064 = vpack.c.b16 %v1049, %v1048
        %v1065 = vpack.c.b16 %v1051, %v1050
        %v1066 = vpack.c.b16 %v1053, %v1052
        %v1067 = vpack.c.b16 %v1055, %v1054
        %v1068 = vpack.c.b16 %v1057, %v1056
        %v1069 = vpack.c.b16 %v1059, %v1058
        %v1070 = vpack.c.b16 %v1061, %v1060
        %v1071 = vpack.c.b16 %v1063, %v1062
        %1080 = vmatprep.subr.bf16.mxu0 0
        %1081 = vmatpush1.bf16.msra.mxu0 %v1064
        %1082 = vmatprep.subr.bf16.mxu0 0
        %1083 = vmatpush1.bf16.msra.mxu0 %v1065
        %1084 = vmatprep.subr.bf16.mxu0 0
        %1085 = vmatpush1.bf16.msra.mxu0 %v1066
        %1086 = vmatprep.subr.bf16.mxu0 0
        %1087 = vmatpush1.bf16.msra.mxu0 %v1067
        %1088 = vmatprep.subr.bf16.mxu0 0
        %1089 = vmatpush1.bf16.msra.mxu0 %v1068
        %1090 = vmatprep.subr.bf16.mxu0 0
        %1091 = vmatpush1.bf16.msra.mxu0 %v1069
        %1092 = vmatprep.subr.bf16.mxu0 0
        %1093 = vmatpush1.bf16.msra.mxu0 %v1070
        %1094 = vmatprep.subr.bf16.mxu0 0
        %1095 = vmatpush1.bf16.msra.mxu0 %v1071
        %1096 = vmatprep.subr.bf16.mxu0 0
        %1097 = vmatpush1.bf16.msra.mxu0 0
        %1098 = vmatprep.subr.bf16.mxu0 0
        %1099 = vmatpush1.bf16.msra.mxu0 0
        %1100 = vmatprep.subr.bf16.mxu0 0
        %1101 = vmatpush1.bf16.msra.mxu0 0
        %1102 = vmatprep.subr.bf16.mxu0 0
        %1103 = vmatpush1.bf16.msra.mxu0 0
        %1104 = vmatprep.subr.bf16.mxu0 0
        %1105 = vmatpush1.bf16.msra.mxu0 0
        %1106 = vmatprep.subr.bf16.mxu0 0
        %1107 = vmatpush1.bf16.msra.mxu0 0
        %1108 = vmatprep.subr.bf16.mxu0 0
        %1109 = vmatpush1.bf16.msra.mxu0 0
        %1110 = vmatprep.subr.bf16.mxu0 0
        %1111 = vmatpush1.bf16.msra.mxu0 0
        %1112 = vmatprep.mubr.bf16.mxu0 0
        %1113 = vmatmul.mubr.bf16.gmra.mrb[0].mxu0 %v1015
        %v1114 = vpop.f32.mrb[0].mxu0
        %v1115 = vadd.f32 0.0, %v1114
        %v1116 = vpop.f32.mrb[0].mxu0
        %v1117 = vpop.f32.mrb[0].mxu0
        %v1118 = vpop.f32.mrb[0].mxu0
        %1119 = vdwg.mxu0
        %v1120 = vld [vmem:[#allocation3] sm:$0xff]
        %v1121 = vmul.f32 %v1120, 0.9
        %v1122 = vadd.f32 %v1121, %v1115
        %vm1123 = vcmp.ge.f32.partialorder %v1122, 1.0
        %v1124 = vsel %vm1123, 1.0, 0.0
        %s1125 = scalar_lea.vmem %s234, 40 [#allocation11]
        %1126 = vst [vmem:[%s1125] sm:$0xff] %v1124
        %v1127 = vsel %vm1123, 0.0, %v1122
        %1128 = vst [vmem:[#allocation3] sm:$0xff] %v1127
        %v1129 = vld [vmem:[#allocation2] sm:$0xff]
        %v1130 = vmul.f32 %v1129, 0.9
        %s1131 = scalar_lea.vmem [#allocation4], 48
        %v1132 = vld [vmem:[%s1131] sm:$0xff]
        %v1133 = vadd.f32 %v1130, %v1132
        %vm1134 = vcmp.ge.f32.partialorder %v1133, 1.0
        %v1135 = vsel %vm1134, 1.0, 0.0
        %v1136 = vsel %vm1134, 0.0, %v1133
        %1137 = vst [vmem:[#allocation2] sm:$0xff] %v1136
        %v1138 = vpack.c.bf16 %v1135, %v1135
        %v1139 = vld [vmem:[#allocation10] sm:$0xf]
        %v1140 = vld [vmem:[#allocation10 + $0x4] sm:$0xf]
        %v1141 = vld [vmem:[#allocation10 + $0x8] sm:$0xf]
        %v1142 = vld [vmem:[#allocation10 + $0xc] sm:$0xf]
        %v1143 = vld [vmem:[#allocation10 + $0x10] sm:$0xf]
        %v1144 = vld [vmem:[#allocation10 + $0x14] sm:$0xf]
        %v1145 = vld [vmem:[#allocation10 + $0x18] sm:$0xf]
        %v1146 = vld [vmem:[#allocation10 + $0x1c] sm:$0xf]
        %v1147 = vld [vmem:[#allocation10 + $0x20] sm:$0xf]
        %v1148 = vld [vmem:[#allocation10 + $0x24] sm:$0xf]
        %v1149 = vld [vmem:[#allocation10 + $0x28] sm:$0xf]
        %v1150 = vld [vmem:[#allocation10 + $0x2c] sm:$0xf]
        %v1151 = vld [vmem:[#allocation10 + $0x30] sm:$0xf]
        %v1152 = vld [vmem:[#allocation10 + $0x34] sm:$0xf]
        %v1153 = vld [vmem:[#allocation10 + $0x38] sm:$0xf]
        %v1154 = vld [vmem:[#allocation10 + $0x3c] sm:$0xf]
        %v1171 = vunpack.c.l.b16 %v1139
        %v1172 = vunpack.c.l.b16 %v1140
        %v1173 = vunpack.c.l.b16 %v1141
        %v1174 = vunpack.c.l.b16 %v1142
        %v1175 = vunpack.c.l.b16 %v1143
        %v1176 = vunpack.c.l.b16 %v1144
        %v1177 = vunpack.c.l.b16 %v1145
        %v1178 = vunpack.c.l.b16 %v1146
        %v1179 = vunpack.c.l.b16 %v1147
        %v1180 = vunpack.c.l.b16 %v1148
        %v1181 = vunpack.c.l.b16 %v1149
        %v1182 = vunpack.c.l.b16 %v1150
        %v1183 = vunpack.c.l.b16 %v1151
        %v1184 = vunpack.c.l.b16 %v1152
        %v1185 = vunpack.c.l.b16 %v1153
        %v1186 = vunpack.c.l.b16 %v1154
        %v1187 = vpack.c.b16 %v1172, %v1171
        %v1188 = vpack.c.b16 %v1174, %v1173
        %v1189 = vpack.c.b16 %v1176, %v1175
        %v1190 = vpack.c.b16 %v1178, %v1177
        %v1191 = vpack.c.b16 %v1180, %v1179
        %v1192 = vpack.c.b16 %v1182, %v1181
        %v1193 = vpack.c.b16 %v1184, %v1183
        %v1194 = vpack.c.b16 %v1186, %v1185
        %1203 = vmatprep.subr.bf16.mxu0 0
        %1204 = vmatpush1.bf16.msra.mxu0 %v1187
        %1205 = vmatprep.subr.bf16.mxu0 0
        %1206 = vmatpush1.bf16.msra.mxu0 %v1188
        %1207 = vmatprep.subr.bf16.mxu0 0
        %1208 = vmatpush1.bf16.msra.mxu0 %v1189
        %1209 = vmatprep.subr.bf16.mxu0 0
        %1210 = vmatpush1.bf16.msra.mxu0 %v1190
        %1211 = vmatprep.subr.bf16.mxu0 0
        %1212 = vmatpush1.bf16.msra.mxu0 %v1191
        %1213 = vmatprep.subr.bf16.mxu0 0
        %1214 = vmatpush1.bf16.msra.mxu0 %v1192
        %1215 = vmatprep.subr.bf16.mxu0 0
        %1216 = vmatpush1.bf16.msra.mxu0 %v1193
        %1217 = vmatprep.subr.bf16.mxu0 0
        %1218 = vmatpush1.bf16.msra.mxu0 %v1194
        %1219 = vmatprep.subr.bf16.mxu0 0
        %1220 = vmatpush1.bf16.msra.mxu0 0
        %1221 = vmatprep.subr.bf16.mxu0 0
        %1222 = vmatpush1.bf16.msra.mxu0 0
        %1223 = vmatprep.subr.bf16.mxu0 0
        %1224 = vmatpush1.bf16.msra.mxu0 0
        %1225 = vmatprep.subr.bf16.mxu0 0
        %1226 = vmatpush1.bf16.msra.mxu0 0
        %1227 = vmatprep.subr.bf16.mxu0 0
        %1228 = vmatpush1.bf16.msra.mxu0 0
        %1229 = vmatprep.subr.bf16.mxu0 0
        %1230 = vmatpush1.bf16.msra.mxu0 0
        %1231 = vmatprep.subr.bf16.mxu0 0
        %1232 = vmatpush1.bf16.msra.mxu0 0
        %1233 = vmatprep.subr.bf16.mxu0 0
        %1234 = vmatpush1.bf16.msra.mxu0 0
        %1235 = vmatprep.mubr.bf16.mxu0 0
        %1236 = vmatmul.mubr.bf16.gmra.mrb[0].mxu0 %v1138
        %v1237 = vpop.f32.mrb[0].mxu0
        %v1238 = vadd.f32 0.0, %v1237
        %v1239 = vpop.f32.mrb[0].mxu0
        %v1240 = vpop.f32.mrb[0].mxu0
        %v1241 = vpop.f32.mrb[0].mxu0
        %1242 = vdwg.mxu0
        %v1243 = vld [vmem:[#allocation3] sm:$0xff]
        %v1244 = vmul.f32 %v1243, 0.9
        %v1245 = vadd.f32 %v1244, %v1238
        %vm1246 = vcmp.ge.f32.partialorder %v1245, 1.0
        %v1247 = vsel %vm1246, 1.0, 0.0
        %s1248 = scalar_lea.vmem %s234, 48 [#allocation11]
        %1249 = vst [vmem:[%s1248] sm:$0xff] %v1247
        %v1250 = vsel %vm1246, 0.0, %v1245
        %1251 = vst [vmem:[#allocation3] sm:$0xff] %v1250
        %v1252 = vld [vmem:[#allocation2] sm:$0xff]
        %v1253 = vmul.f32 %v1252, 0.9
        %s1254 = scalar_lea.vmem [#allocation4], 56
        %v1255 = vld [vmem:[%s1254] sm:$0xff]
        %v1256 = vadd.f32 %v1253, %v1255
        %vm1257 = vcmp.ge.f32.partialorder %v1256, 1.0
        %v1258 = vsel %vm1257, 1.0, 0.0
        %v1259 = vsel %vm1257, 0.0, %v1256
        %1260 = vst [vmem:[#allocation2] sm:$0xff] %v1259
        %v1261 = vpack.c.bf16 %v1258, %v1258
        %v1262 = vld [vmem:[#allocation10] sm:$0xf]
        %v1263 = vld [vmem:[#allocation10 + $0x4] sm:$0xf]
        %v1264 = vld [vmem:[#allocation10 + $0x8] sm:$0xf]
        %v1265 = vld [vmem:[#allocation10 + $0xc] sm:$0xf]
        %v1266 = vld [vmem:[#allocation10 + $0x10] sm:$0xf]
        %v1267 = vld [vmem:[#allocation10 + $0x14] sm:$0xf]
        %v1268 = vld [vmem:[#allocation10 + $0x18] sm:$0xf]
        %v1269 = vld [vmem:[#allocation10 + $0x1c] sm:$0xf]
        %v1270 = vld [vmem:[#allocation10 + $0x20] sm:$0xf]
        %v1271 = vld [vmem:[#allocation10 + $0x24] sm:$0xf]
        %v1272 = vld [vmem:[#allocation10 + $0x28] sm:$0xf]
        %v1273 = vld [vmem:[#allocation10 + $0x2c] sm:$0xf]
        %v1274 = vld [vmem:[#allocation10 + $0x30] sm:$0xf]
        %v1275 = vld [vmem:[#allocation10 + $0x34] sm:$0xf]
        %v1276 = vld [vmem:[#allocation10 + $0x38] sm:$0xf]
        %v1277 = vld [vmem:[#allocation10 + $0x3c] sm:$0xf]
        %v1294 = vunpack.c.l.b16 %v1262
        %v1295 = vunpack.c.l.b16 %v1263
        %v1296 = vunpack.c.l.b16 %v1264
        %v1297 = vunpack.c.l.b16 %v1265
        %v1298 = vunpack.c.l.b16 %v1266
        %v1299 = vunpack.c.l.b16 %v1267
        %v1300 = vunpack.c.l.b16 %v1268
        %v1301 = vunpack.c.l.b16 %v1269
        %v1302 = vunpack.c.l.b16 %v1270
        %v1303 = vunpack.c.l.b16 %v1271
        %v1304 = vunpack.c.l.b16 %v1272
        %v1305 = vunpack.c.l.b16 %v1273
        %v1306 = vunpack.c.l.b16 %v1274
        %v1307 = vunpack.c.l.b16 %v1275
        %v1308 = vunpack.c.l.b16 %v1276
        %v1309 = vunpack.c.l.b16 %v1277
        %v1310 = vpack.c.b16 %v1295, %v1294
        %v1311 = vpack.c.b16 %v1297, %v1296
        %v1312 = vpack.c.b16 %v1299, %v1298
        %v1313 = vpack.c.b16 %v1301, %v1300
        %v1314 = vpack.c.b16 %v1303, %v1302
        %v1315 = vpack.c.b16 %v1305, %v1304
        %v1316 = vpack.c.b16 %v1307, %v1306
        %v1317 = vpack.c.b16 %v1309, %v1308
        %1326 = vmatprep.subr.bf16.mxu0 0
        %1327 = vmatpush1.bf16.msra.mxu0 %v1310
        %1328 = vmatprep.subr.bf16.mxu0 0
        %1329 = vmatpush1.bf16.msra.mxu0 %v1311
        %1330 = vmatprep.subr.bf16.mxu0 0
        %1331 = vmatpush1.bf16.msra.mxu0 %v1312
        %1332 = vmatprep.subr.bf16.mxu0 0
        %1333 = vmatpush1.bf16.msra.mxu0 %v1313
        %1334 = vmatprep.subr.bf16.mxu0 0
        %1335 = vmatpush1.bf16.msra.mxu0 %v1314
        %1336 = vmatprep.subr.bf16.mxu0 0
        %1337 = vmatpush1.bf16.msra.mxu0 %v1315
        %1338 = vmatprep.subr.bf16.mxu0 0
        %1339 = vmatpush1.bf16.msra.mxu0 %v1316
        %1340 = vmatprep.subr.bf16.mxu0 0
        %1341 = vmatpush1.bf16.msra.mxu0 %v1317
        %1342 = vmatprep.subr.bf16.mxu0 0
        %1343 = vmatpush1.bf16.msra.mxu0 0
        %1344 = vmatprep.subr.bf16.mxu0 0
        %1345 = vmatpush1.bf16.msra.mxu0 0
        %1346 = vmatprep.subr.bf16.mxu0 0
        %1347 = vmatpush1.bf16.msra.mxu0 0
        %1348 = vmatprep.subr.bf16.mxu0 0
        %1349 = vmatpush1.bf16.msra.mxu0 0
        %1350 = vmatprep.subr.bf16.mxu0 0
        %1351 = vmatpush1.bf16.msra.mxu0 0
        %1352 = vmatprep.subr.bf16.mxu0 0
        %1353 = vmatpush1.bf16.msra.mxu0 0
        %1354 = vmatprep.subr.bf16.mxu0 0
        %1355 = vmatpush1.bf16.msra.mxu0 0
        %1356 = vmatprep.subr.bf16.mxu0 0
        %1357 = vmatpush1.bf16.msra.mxu0 0
        %1358 = vmatprep.mubr.bf16.mxu0 0
        %1359 = vmatmul.mubr.bf16.gmra.mrb[0].mxu0 %v1261
        %v1360 = vpop.f32.mrb[0].mxu0
        %v1361 = vadd.f32 0.0, %v1360
        %v1362 = vpop.f32.mrb[0].mxu0
        %v1363 = vpop.f32.mrb[0].mxu0
        %v1364 = vpop.f32.mrb[0].mxu0
        %1365 = vdwg.mxu0
        %v1366 = vld [vmem:[#allocation3] sm:$0xff]
        %v1367 = vmul.f32 %v1366, 0.9
        %v1368 = vadd.f32 %v1367, %v1361
        %vm1369 = vcmp.ge.f32.partialorder %v1368, 1.0
        %v1370 = vsel %vm1369, 1.0, 0.0
        %s1371 = scalar_lea.vmem %s234, 56 [#allocation11]
        %1372 = vst [vmem:[%s1371] sm:$0xff] %v1370
        %v1373 = vsel %vm1369, 0.0, %v1368
        %1374 = vst [vmem:[#allocation3] sm:$0xff] %v1373
        %s1375 = sand.u32 %s113, 1
        %s1376 = scalar_lea.sflag [#allocation7], %s1375
        %s1377 = sand.u32 %s113, 1
        %s1378 = smul.addr %s1377, 64
        %s1379 = scalar_lea.vmem [#allocation11], %s1378
        // Predicated region
        $region49: #{tpu_custom_call.1} parent=31 // pred_check
          %p1380 = pneg %p123
        $region50: #{tpu_custom_call.1} parent=31 // pred_check_branch
          %1382 = sbr.rel (%p1380) target = $region52
        $region51: #{tpu_custom_call.1} parent=31 // pred_region
          %s1383 = smul.u32 8, %s26
          %s1385 = ssub.s32 1024, 1024
          %1386 = vsyncadd %s1376, %s1385
          %s1387 = sadd.s32 %s25, %s1383
          %s1388 = smul.addr %s1387, 128
          %s1389 = scalar_lea.hbm %s3, %s1388
          %s1390 = sshll.u32 %s1379, 4
          %s1391 = int_to_ptr.vmem [resolvable:$true] %s1390
          %1396 = dma.vmem_to_hbm [thread:$0]  %s1391, 1024, %s1389, %s1376, 128, 128, 8
        $region52: #{tpu_custom_call.1} parent=31 // pred_fallthru
          _
      $region32: #{tpu_custom_call.1} parent=5 // pred_fallthru
        _
      %p1397 = scmp.le.s32.totalorder 2, %s16
      // Predicated region
      $region53: #{tpu_custom_call.1} parent=5 // pred_check
        %p1398 = pneg %p1397
      $region54: #{tpu_custom_call.1} parent=5 // pred_check_branch
        %1400 = sbr.rel (%p1398) target = $region56
      $region55: #{tpu_custom_call.1} parent=5 // pred_region
        %s1401 = ssub.s32 %s16, 2
        // Predicated region
        $region57: #{tpu_custom_call.1} parent=55 // pred_check
          %p1402 = pneg %p129
        $region58: #{tpu_custom_call.1} parent=55 // pred_check_branch
          %1404 = sbr.rel (%p1402) target = $region60
        $region59: #{tpu_custom_call.1} parent=55 // pred_region
          %s1405 = sand.u32 %s114, 1
          %s1406 = scalar_lea.sflag [#allocation7], %s1405
          %s1407 = sand.u32 %s114, 1
          %s1408 = smul.addr %s1407, 64
          %s1409 = scalar_lea.vmem [#allocation11], %s1408
          %1410 = dma.done %s1406, 1024
        $region60: #{tpu_custom_call.1} parent=55 // pred_fallthru
          _
      $region56: #{tpu_custom_call.1} parent=5 // pred_fallthru
        _
    $region6: #{tpu_custom_call.1} parent=1 // loop_footer
      %s20 = sadd.s32 1, %s16
    $region7: #{tpu_custom_call.1} parent=1 // loop_footer_branch
      %15 = sbr.rel target = $region3
    $region8: #{tpu_custom_call.1} parent=1 // loop_exit
      _
    %1411 = vsyncpa [#allocation6], 1
    %s1412 = scalar_lea.sflag [#allocation6], 1
    %1413 = vsyncpa %s1412, 1
    %1414 = vsyncpa [#allocation9], 1
    %1415 = vsyncpa [#allocation7], 1
    %s1416 = scalar_lea.sflag [#allocation7], 1
    %1417 = vsyncpa %s1416, 1

</llo_original>
